<compile_context>
chip_gen: v5e
topology: v5e:2x2
jax: 0.10.0
libtpu: 0.0.40
codegen_flags: <defaults>
</compile_context>

<pallas_src>
import jax
import jax.numpy as jnp
from jax.experimental import pallas as pl
from jax.experimental.pallas import tpu as pltpu

LANE = 128   # lane tile (last dim)
SUB = 8      # sublane tile (second-to-last dim)


def _round_up(x, m):
    return ((x + m - 1) // m) * m


def _pad2(x, rows, cols):
    r, c = x.shape
    return jnp.pad(x, ((0, rows - r), (0, cols - c)))


# ----------------------------------------------------------------------------
# Fused Pallas kernel: encoders + concat + FFW head for one question + its
# (padded) paragraphs.
# ----------------------------------------------------------------------------
def _retriever_kernel(q_ids_ref, q_type_ref, q_pmask_ref,
                      p_ids_ref, p_type_ref, p_poolmat_ref,
                      q_tok_ref, q_typetab_ref, q_w_ref, q_b_ref,
                      p_tok_ref, p_typetab_ref, p_w_ref, p_b_ref,
                      w1q_ref, w1p_ref, b1_ref, w2_ref, b2_ref,
                      w3_ref, b3_ref, o_ref):
    f32 = jnp.float32

    def embed_tokens(ids, type_ids, tok_tab, type_tab):
        # ids / type_ids: [T, 1] int32 (token positions on sublanes)
        # tok_tab: [V, E] (zero-padded), type_tab: [8, E] (rows 0/1 used)
        T = ids.shape[0]
        V = tok_tab.shape[0]
        # Embedding gather as a one-hot MXU matmul (tables stay in VMEM).
        onehot = (ids == jax.lax.broadcasted_iota(jnp.int32, (T, V), 1)
                  ).astype(f32)                                       # [T, V]
        tok = jnp.dot(onehot, tok_tab, preferred_element_type=f32)    # [T, E]
        # Token-type vocab is {0, 1}: exact 2-row interpolation on the VPU.
        t0 = type_tab[0:1, :]
        t1 = type_tab[1:2, :]
        return tok + t0 + type_ids.astype(f32) * (t1 - t0)            # [T, E]

    def pool_project(emb, poolmat, w, b):
        # emb: [T, E]; poolmat: [R, T] -- row r holds row r's attention mask,
        # so the masked sequence-sum is an MXU matvec, not an XLU reduce.
        summed = jnp.dot(poolmat, emb, preferred_element_type=f32)    # [R, E]
        count = jnp.maximum(jnp.sum(poolmat, axis=-1, keepdims=True), 1.0)
        pooled = summed * pl.reciprocal(count, approx=True)           # EUP
        return jnp.tanh(jnp.dot(pooled, w, preferred_element_type=f32) + b)

    # ---- question encoder (one question per grid step) ----
    q_emb = pool_project(
        embed_tokens(q_ids_ref[0], q_type_ref[0],
                     q_tok_ref[...], q_typetab_ref[...]),
        q_pmask_ref[0], q_w_ref[...], q_b_ref[...])                   # [1, H]

    # ---- paragraph encoder (all padded paragraphs of this question) ----
    p_emb = pool_project(
        embed_tokens(p_ids_ref[0], p_type_ref[0],
                     p_tok_ref[...], p_typetab_ref[...]),
        p_poolmat_ref[0], p_w_ref[...], p_b_ref[...])                 # [Pp, H]

    # ---- fused concat + FFW head: [q | p] @ w1 == q @ w1_q + p @ w1_p ----
    h1 = jnp.dot(p_emb, w1p_ref[...], preferred_element_type=f32)
    h1 = h1 + jnp.dot(q_emb, w1q_ref[...], preferred_element_type=f32)  # bcast
    h1 = jnp.maximum(h1 + b1_ref[...], 0.0)
    # TODO(synk): dropout layers are identity in eval mode; omitted here.
    h2 = jnp.maximum(jnp.dot(h1, w2_ref[...], preferred_element_type=f32)
                     + b2_ref[...], 0.0)
    # Final Linear(L2 -> 1): VPU multiply + lane reduction (no 1-wide matmul).
    logit = jnp.sum(h2 * w3_ref[...], axis=-1, keepdims=True) + b3_ref[...]
    # Lane-dense store: full [P_pad, 128] vreg tile; wrapper slices column 0.
    o_ref[...] = jnp.broadcast_to(logit, o_ref.shape)


# ----------------------------------------------------------------------------
# Wrapper: input layout prep + pallas_call
# ----------------------------------------------------------------------------
def feed_forward_retriever_forward(pp,
                                   input_ids_question,
                                   attention_mask_question,
                                   token_type_ids_question,
                                   batch_input_ids_paragraphs,
                                   batch_attention_mask_paragraphs,
                                   batch_token_type_ids_paragraphs):
    B, Sq = input_ids_question.shape
    _, P, Sp = batch_input_ids_paragraphs.shape
    Sq_p = _round_up(Sq, SUB)
    Sp_p = _round_up(Sp, SUB)
    P_p = _round_up(P, SUB)
    RS = P_p * Sp_p

    # Question tensors: token positions on the sublane axis ([Sq_p, 1]).
    q_ids = jnp.pad(input_ids_question.astype(jnp.int32),
                    ((0, 0), (0, Sq_p - Sq)))[:, :, None]
    q_type = jnp.pad(token_type_ids_question.astype(jnp.int32),
                     ((0, 0), (0, Sq_p - Sq)))[:, :, None]
    q_pmask = jnp.pad(attention_mask_question.astype(jnp.float32),
                      ((0, 0), (0, Sq_p - Sq)))[:, None, :]            # [B,1,Sq_p]

    # Paragraph tensors: (P_pad * Sp_pad) token rows on sublanes.
    pad3 = ((0, 0), (0, P_p - P), (0, Sp_p - Sp))
    p_ids = jnp.pad(batch_input_ids_paragraphs.astype(jnp.int32), pad3)
    p_type = jnp.pad(batch_token_type_ids_paragraphs.astype(jnp.int32), pad3)
    p_mask = jnp.pad(batch_attention_mask_paragraphs.astype(jnp.float32), pad3)
    p_ids3 = p_ids.reshape(B, RS, 1)
    p_type3 = p_type.reshape(B, RS, 1)
    # Block-diagonal pooling matrix: poolmat[b, p, p*Sp_p + s] = mask[b, p, s]
    eye = jnp.eye(P_p, dtype=jnp.float32)
    p_poolmat = (p_mask[:, :, None, :] * eye[None, :, :, None]).reshape(B, P_p, RS)

    Vp, Ep = pp["q_tok_tab"].shape
    Hp = pp["q_w"].shape[1]
    L1p = pp["w1_q"].shape[1]
    L2p = pp["w2"].shape[1]

    out = pl.pallas_call(
        _retriever_kernel,
        out_shape=jax.ShapeDtypeStruct((B * P_p, LANE), jnp.float32),
        grid=(B,),
        in_specs=[
            pl.BlockSpec((1, Sq_p, 1), lambda b: (b, 0, 0)),    # q_ids
            pl.BlockSpec((1, Sq_p, 1), lambda b: (b, 0, 0)),    # q_type
            pl.BlockSpec((1, 1, Sq_p), lambda b: (b, 0, 0)),    # q_pmask
            pl.BlockSpec((1, RS, 1), lambda b: (b, 0, 0)),      # p_ids
            pl.BlockSpec((1, RS, 1), lambda b: (b, 0, 0)),      # p_type
            pl.BlockSpec((1, P_p, RS), lambda b: (b, 0, 0)),    # p_poolmat
            pl.BlockSpec((Vp, Ep), lambda b: (0, 0)),           # q_tok_tab
            pl.BlockSpec((SUB, Ep), lambda b: (0, 0)),          # q_type_tab
            pl.BlockSpec((Ep, Hp), lambda b: (0, 0)),           # q_w
            pl.BlockSpec((1, Hp), lambda b: (0, 0)),            # q_b
            pl.BlockSpec((Vp, Ep), lambda b: (0, 0)),           # p_tok_tab
            pl.BlockSpec((SUB, Ep), lambda b: (0, 0)),          # p_type_tab
            pl.BlockSpec((Ep, Hp), lambda b: (0, 0)),           # p_w
            pl.BlockSpec((1, Hp), lambda b: (0, 0)),            # p_b
            pl.BlockSpec((Hp, L1p), lambda b: (0, 0)),          # w1_q
            pl.BlockSpec((Hp, L1p), lambda b: (0, 0)),          # w1_p
            pl.BlockSpec((1, L1p), lambda b: (0, 0)),           # b1
            pl.BlockSpec((L1p, L2p), lambda b: (0, 0)),         # w2
            pl.BlockSpec((1, L2p), lambda b: (0, 0)),           # b2
            pl.BlockSpec((1, L2p), lambda b: (0, 0)),           # w3 (row)
            pl.BlockSpec((1, 1), lambda b: (0, 0)),             # b3
        ],
        out_specs=pl.BlockSpec((P_p, LANE), lambda b: (b, 0)),
        compiler_params=pltpu.CompilerParams(
            dimension_semantics=("parallel",)),
    )(q_ids, q_type, q_pmask, p_ids3, p_type3, p_poolmat,
      pp["q_tok_tab"], pp["q_type_tab"], pp["q_w"], pp["q_b"],
      pp["p_tok_tab"], pp["p_type_tab"], pp["p_w"], pp["p_b"],
      pp["w1_q"], pp["w1_p"], pp["b1"], pp["w2"], pp["b2"],
      pp["w3"], pp["b3"])

    # Lane-dense output tile -> logical [B, P] logits (== logits.squeeze(2)).
    return out[:, 0].reshape(B, P_p)[:, :P]


# ----------------------------------------------------------------------------
# Parameters: logical sizes + one-time zero-padding to hardware tiles
# ----------------------------------------------------------------------------
def make_params(key, vocab=50, embed=16, hidden=32, layer_sizes=(32, 16)):
    ks = jax.random.split(key, 12)
    scale = 0.1
    h2 = 2 * hidden
    l1, l2 = layer_sizes
    return {
        "q_tok_embed": scale * jax.random.normal(ks[0], (vocab, embed), jnp.float32),
        "q_type_embed": scale * jax.random.normal(ks[1], (2, embed), jnp.float32),
        "q_proj_w": scale * jax.random.normal(ks[2], (embed, hidden), jnp.float32),
        "q_proj_b": scale * jax.random.normal(ks[3], (1, hidden), jnp.float32),
        "p_tok_embed": scale * jax.random.normal(ks[4], (vocab, embed), jnp.float32),
        "p_type_embed": scale * jax.random.normal(ks[5], (2, embed), jnp.float32),
        "p_proj_w": scale * jax.random.normal(ks[6], (embed, hidden), jnp.float32),
        "p_proj_b": scale * jax.random.normal(ks[7], (1, hidden), jnp.float32),
        "w1": scale * jax.random.normal(ks[8], (h2, l1), jnp.float32),
        "b1": jnp.zeros((1, l1), jnp.float32),
        "w2": scale * jax.random.normal(ks[9], (l1, l2), jnp.float32),
        "b2": jnp.zeros((1, l2), jnp.float32),
        "w3": scale * jax.random.normal(ks[10], (l2, 1), jnp.float32),
        "b3": jnp.zeros((1, 1), jnp.float32),
    }


def prepare_params(params):
    """Zero-pad all weights once at init so every kernel operand is
    (8,128)-tile aligned; w1 is split into the q-half and p-half so the
    concatenation never materializes."""
    E, H = params["q_proj_w"].shape
    V = params["q_tok_embed"].shape[0]
    L1 = params["w1"].shape[1]
    L2 = params["w2"].shape[1]
    Ep, Hp, L1p, L2p = (_round_up(d, LANE) for d in (E, H, L1, L2))
    # TODO(synk): at real BERT vocab sizes the table exceeds VMEM -- gather
    # rows via scalar-prefetch / manual DMA instead of the one-hot matmul.
    Vp = _round_up(V, LANE)
    w1 = params["w1"]
    return {
        "q_tok_tab": _pad2(params["q_tok_embed"], Vp, Ep),
        "q_type_tab": _pad2(params["q_type_embed"], SUB, Ep),
        "q_w": _pad2(params["q_proj_w"], Ep, Hp),
        "q_b": _pad2(params["q_proj_b"], 1, Hp),
        "p_tok_tab": _pad2(params["p_tok_embed"], Vp, Ep),
        "p_type_tab": _pad2(params["p_type_embed"], SUB, Ep),
        "p_w": _pad2(params["p_proj_w"], Ep, Hp),
        "p_b": _pad2(params["p_proj_b"], 1, Hp),
        "w1_q": _pad2(w1[:H, :], Hp, L1p),
        "w1_p": _pad2(w1[H:, :], Hp, L1p),
        "b1": _pad2(params["b1"], 1, L1p),
        "w2": _pad2(params["w2"], L1p, L2p),
        "b2": _pad2(params["b2"], 1, L2p),
        "w3": _pad2(params["w3"].T, 1, L2p),
        "b3": params["b3"],
    }


# ----------------------------------------------------------------------------
# Pure-JAX reference (unpadded, exact divide) for a correctness check
# ----------------------------------------------------------------------------
def reference_forward(params, q_ids, q_mask, q_type, p_ids, p_mask, p_type):
    def encode(ids, mask, types, tok_tab, type_tab, w, b):
        emb = tok_tab[ids] + type_tab[types]
        m = mask.astype(jnp.float32)[..., None]
        pooled = (emb * m).sum(1) / jnp.maximum(m.sum(1), 1.0)
        return jnp.tanh(pooled @ w + b)

    B, P, Sp = p_ids.shape
    q_emb = encode(q_ids, q_mask, q_type, params["q_tok_embed"],
                   params["q_type_embed"], params["q_proj_w"], params["q_proj_b"])
    p_emb = encode(p_ids.reshape(B * P, Sp), p_mask.reshape(B * P, Sp),
                   p_type.reshape(B * P, Sp), params["p_tok_embed"],
                   params["p_type_embed"], params["p_proj_w"], params["p_proj_b"])
    H = q_emb.shape[-1]
    concat = jnp.concatenate(
        [jnp.broadcast_to(q_emb[:, None, :], (B, P, H)),
         p_emb.reshape(B, P, H)], axis=2).reshape(B * P, 2 * H)
    h1 = jnp.maximum(concat @ params["w1"] + params["b1"], 0.0)
    h2 = jnp.maximum(h1 @ params["w2"] + params["b2"], 0.0)
    return (h2 @ params["w3"] + params["b3"]).reshape(B, P)


if __name__ == "__main__":
    key = jax.random.PRNGKey(0)
    k_param, k_q, k_p = jax.random.split(key, 3)

    B, P = 2, 3          # batch, paragraphs per question
    Sq, Sp = 8, 8        # question / paragraph max lengths
    VOCAB = 50

    params = make_params(k_param, vocab=VOCAB, embed=16, hidden=32,
                         layer_sizes=(32, 16))
    padded_params = prepare_params(params)

    input_ids_question = jax.random.randint(k_q, (B, Sq), 0, VOCAB, jnp.int32)
    batch_input_ids_paragraphs = jax.random.randint(
        k_p, (B, P, Sp), 0, VOCAB, jnp.int32)

    attention_mask_question = (
        jnp.arange(Sq)[None, :] < jnp.array([[Sq], [Sq - 2]])).astype(jnp.int32)
    batch_attention_mask_paragraphs = (
        jnp.arange(Sp)[None, None, :] < (Sp - jnp.arange(P)[None, :, None])
    ).astype(jnp.int32) * jnp.ones((B, P, Sp), jnp.int32)

    token_type_ids_question = jnp.zeros((B, Sq), jnp.int32)
    batch_token_type_ids_paragraphs = jnp.zeros((B, P, Sp), jnp.int32)

    fwd = jax.jit(feed_forward_retriever_forward)
    logits = fwd(padded_params,
                 input_ids_question, attention_mask_question,
                 token_type_ids_question, batch_input_ids_paragraphs,
                 batch_attention_mask_paragraphs,
                 batch_token_type_ids_paragraphs)
    logits = jax.block_until_ready(logits)

    ref = reference_forward(params, input_ids_question, attention_mask_question,
                            token_type_ids_question, batch_input_ids_paragraphs,
                            batch_attention_mask_paragraphs,
                            batch_token_type_ids_paragraphs)

    assert logits.shape == (B, P), logits.shape
    assert logits.dtype == jnp.float32
    assert bool(jnp.all(jnp.isfinite(logits)))
    assert jnp.allclose(logits, ref, atol=2e-2, rtol=2e-2), (logits, ref)
    print("KERNEL_OK")
</pallas_src>

<mosaic_0001>
module attributes {stable_mosaic.version = 11 : i64} {
  func.func @_retriever_kernel(%arg0: i32, %arg1: memref<1x8x1xi32, #tpu.memory_space<vmem>>, %arg2: memref<1x8x1xi32, #tpu.memory_space<vmem>>, %arg3: memref<1x1x8xf32, #tpu.memory_space<vmem>>, %arg4: memref<1x64x1xi32, #tpu.memory_space<vmem>>, %arg5: memref<1x64x1xi32, #tpu.memory_space<vmem>>, %arg6: memref<1x8x64xf32, #tpu.memory_space<vmem>>, %arg7: memref<128x128xf32, #tpu.memory_space<vmem>>, %arg8: memref<8x128xf32, #tpu.memory_space<vmem>>, %arg9: memref<128x128xf32, #tpu.memory_space<vmem>>, %arg10: memref<1x128xf32, #tpu.memory_space<vmem>>, %arg11: memref<128x128xf32, #tpu.memory_space<vmem>>, %arg12: memref<8x128xf32, #tpu.memory_space<vmem>>, %arg13: memref<128x128xf32, #tpu.memory_space<vmem>>, %arg14: memref<1x128xf32, #tpu.memory_space<vmem>>, %arg15: memref<128x128xf32, #tpu.memory_space<vmem>>, %arg16: memref<128x128xf32, #tpu.memory_space<vmem>>, %arg17: memref<1x128xf32, #tpu.memory_space<vmem>>, %arg18: memref<128x128xf32, #tpu.memory_space<vmem>>, %arg19: memref<1x128xf32, #tpu.memory_space<vmem>>, %arg20: memref<1x128xf32, #tpu.memory_space<vmem>>, %arg21: memref<1x1xf32, #tpu.memory_space<vmem>>, %arg22: memref<8x128xf32, #tpu.memory_space<vmem>>) attributes {dimension_semantics = [#tpu.dimension_semantics<parallel>], iteration_bounds = array<i64: 2>, scalar_prefetch = 0 : i64, scratch_operands = 0 : i64, tpu.core_type = #tpu.core_type<tc>, window_params = [{transform_indices = @transform_0, window_bounds = array<i64: 1, 8, 1>}, {transform_indices = @transform_1, window_bounds = array<i64: 1, 8, 1>}, {transform_indices = @transform_2, window_bounds = array<i64: 1, 1, 8>}, {transform_indices = @transform_3, window_bounds = array<i64: 1, 64, 1>}, {transform_indices = @transform_4, window_bounds = array<i64: 1, 64, 1>}, {transform_indices = @transform_5, window_bounds = array<i64: 1, 8, 64>}, {pipeline_mode = #tpu.pipeline_mode<synchronous>, transform_indices = @transform_6, window_bounds = array<i64: 128, 128>}, {pipeline_mode = #tpu.pipeline_mode<synchronous>, transform_indices = @transform_7, window_bounds = array<i64: 8, 128>}, {pipeline_mode = #tpu.pipeline_mode<synchronous>, transform_indices = @transform_8, window_bounds = array<i64: 128, 128>}, {pipeline_mode = #tpu.pipeline_mode<synchronous>, transform_indices = @transform_9, window_bounds = array<i64: 1, 128>}, {pipeline_mode = #tpu.pipeline_mode<synchronous>, transform_indices = @transform_10, window_bounds = array<i64: 128, 128>}, {pipeline_mode = #tpu.pipeline_mode<synchronous>, transform_indices = @transform_11, window_bounds = array<i64: 8, 128>}, {pipeline_mode = #tpu.pipeline_mode<synchronous>, transform_indices = @transform_12, window_bounds = array<i64: 128, 128>}, {pipeline_mode = #tpu.pipeline_mode<synchronous>, transform_indices = @transform_13, window_bounds = array<i64: 1, 128>}, {pipeline_mode = #tpu.pipeline_mode<synchronous>, transform_indices = @transform_14, window_bounds = array<i64: 128, 128>}, {pipeline_mode = #tpu.pipeline_mode<synchronous>, transform_indices = @transform_15, window_bounds = array<i64: 128, 128>}, {pipeline_mode = #tpu.pipeline_mode<synchronous>, transform_indices = @transform_16, window_bounds = array<i64: 1, 128>}, {pipeline_mode = #tpu.pipeline_mode<synchronous>, transform_indices = @transform_17, window_bounds = array<i64: 128, 128>}, {pipeline_mode = #tpu.pipeline_mode<synchronous>, transform_indices = @transform_18, window_bounds = array<i64: 1, 128>}, {pipeline_mode = #tpu.pipeline_mode<synchronous>, transform_indices = @transform_19, window_bounds = array<i64: 1, 128>}, {pipeline_mode = #tpu.pipeline_mode<synchronous>, transform_indices = @transform_20, window_bounds = array<i64: 1, 1>}, {transform_indices = @transform_21, window_bounds = array<i64: 8, 128>}]} {
    %c0 = arith.constant 0 : index
    %c0_0 = arith.constant 0 : index
    %c0_1 = arith.constant 0 : index
    %0 = vector.load %arg1[%c0, %c0_0, %c0_1] : memref<1x8x1xi32, #tpu.memory_space<vmem>>, vector<1x8x1xi32>
    %1 = vector.shape_cast %0 : vector<1x8x1xi32> to vector<8x1xi32>
    %c0_2 = arith.constant 0 : index
    %c0_3 = arith.constant 0 : index
    %c0_4 = arith.constant 0 : index
    %2 = vector.load %arg2[%c0_2, %c0_3, %c0_4] : memref<1x8x1xi32, #tpu.memory_space<vmem>>, vector<1x8x1xi32>
    %3 = vector.shape_cast %2 : vector<1x8x1xi32> to vector<8x1xi32>
    %c0_5 = arith.constant 0 : index
    %c0_6 = arith.constant 0 : index
    %4 = vector.load %arg7[%c0_5, %c0_6] : memref<128x128xf32, #tpu.memory_space<vmem>>, vector<128x128xf32>
    %c0_7 = arith.constant 0 : index
    %c0_8 = arith.constant 0 : index
    %5 = vector.load %arg8[%c0_7, %c0_8] : memref<8x128xf32, #tpu.memory_space<vmem>>, vector<8x128xf32>
    %6 = tpu.iota {dimensions = array<i32: 1>} : vector<8x128xi32>
    %7 = vector.broadcast %1 : vector<8x1xi32> to vector<8x128xi32>
    %8 = arith.cmpi eq, %7, %6 : vector<8x128xi32>
    %9 = arith.extui %8 : vector<8x128xi1> to vector<8x128xi32>
    %10 = arith.sitofp %9 : vector<8x128xi32> to vector<8x128xf32>
    %cst = arith.constant dense<0.000000e+00> : vector<8x128xf32>
    %11 = tpu.matmul %10, %4, %cst {dimension_numbers = #tpu.dot_dimension_numbers<[1], [0], [0], [1], [0, 0, 1, 1], [], []>} : vector<8x128xf32>, vector<128x128xf32>, vector<8x128xf32> -> vector<8x128xf32>
    %12 = vector.extract_strided_slice %5 {offsets = [0, 0], sizes = [1, 128], strides = [1, 1]} : vector<8x128xf32> to vector<1x128xf32>
    %13 = vector.extract_strided_slice %5 {offsets = [1, 0], sizes = [1, 128], strides = [1, 1]} : vector<8x128xf32> to vector<1x128xf32>
    %14 = vector.broadcast %12 : vector<1x128xf32> to vector<8x128xf32>
    %15 = arith.addf %11, %14 : vector<8x128xf32>
    %16 = arith.sitofp %3 : vector<8x1xi32> to vector<8x1xf32>
    %17 = arith.subf %13, %12 : vector<1x128xf32>
    %18 = vector.broadcast %16 : vector<8x1xf32> to vector<8x128xf32>
    %19 = vector.broadcast %17 : vector<1x128xf32> to vector<8x128xf32>
    %20 = arith.mulf %18, %19 : vector<8x128xf32>
    %21 = arith.addf %15, %20 : vector<8x128xf32>
    %c0_9 = arith.constant 0 : index
    %c0_10 = arith.constant 0 : index
    %c0_11 = arith.constant 0 : index
    %22 = vector.load %arg3[%c0_9, %c0_10, %c0_11] : memref<1x1x8xf32, #tpu.memory_space<vmem>>, vector<1x1x8xf32>
    %23 = vector.shape_cast %22 : vector<1x1x8xf32> to vector<1x8xf32>
    %c0_12 = arith.constant 0 : index
    %c0_13 = arith.constant 0 : index
    %24 = vector.load %arg9[%c0_12, %c0_13] : memref<128x128xf32, #tpu.memory_space<vmem>>, vector<128x128xf32>
    %c0_14 = arith.constant 0 : index
    %c0_15 = arith.constant 0 : index
    %25 = vector.load %arg10[%c0_14, %c0_15] : memref<1x128xf32, #tpu.memory_space<vmem>>, vector<1x128xf32>
    %cst_16 = arith.constant dense<0.000000e+00> : vector<1x128xf32>
    %26 = tpu.matmul %23, %21, %cst_16 {dimension_numbers = #tpu.dot_dimension_numbers<[1], [0], [0], [1], [0, 0, 1, 1], [], []>} : vector<1x8xf32>, vector<8x128xf32>, vector<1x128xf32> -> vector<1x128xf32>
    %cst_17 = arith.constant dense<0.000000e+00> : vector<1xf32>
    %27 = vector.multi_reduction <add>, %23, %cst_17 [1] : vector<1x8xf32> to vector<1xf32>
    %28 = vector.shape_cast %27 : vector<1xf32> to vector<1x1xf32>
    %cst_18 = arith.constant 1.000000e+00 : f32
    %29 = vector.broadcast %cst_18 : f32 to vector<1x1xf32>
    %30 = arith.maximumf %28, %29 : vector<1x1xf32>
    %31 = tpu.reciprocal %30 {approx = true} : vector<1x1xf32> -> vector<1x1xf32>
    %32 = vector.broadcast %31 : vector<1x1xf32> to vector<1x128xf32>
    %33 = arith.mulf %26, %32 : vector<1x128xf32>
    %cst_19 = arith.constant dense<0.000000e+00> : vector<1x128xf32>
    %34 = tpu.matmul %33, %24, %cst_19 {dimension_numbers = #tpu.dot_dimension_numbers<[1], [0], [0], [1], [0, 0, 1, 1], [], []>} : vector<1x128xf32>, vector<128x128xf32>, vector<1x128xf32> -> vector<1x128xf32>
    %35 = arith.addf %34, %25 : vector<1x128xf32>
    %36 = math.tanh %35 : vector<1x128xf32>
    %c0_20 = arith.constant 0 : index
    %c0_21 = arith.constant 0 : index
    %c0_22 = arith.constant 0 : index
    %37 = vector.load %arg4[%c0_20, %c0_21, %c0_22] : memref<1x64x1xi32, #tpu.memory_space<vmem>>, vector<1x64x1xi32>
    %38 = vector.shape_cast %37 : vector<1x64x1xi32> to vector<64x1xi32>
    %c0_23 = arith.constant 0 : index
    %c0_24 = arith.constant 0 : index
    %c0_25 = arith.constant 0 : index
    %39 = vector.load %arg5[%c0_23, %c0_24, %c0_25] : memref<1x64x1xi32, #tpu.memory_space<vmem>>, vector<1x64x1xi32>
    %40 = vector.shape_cast %39 : vector<1x64x1xi32> to vector<64x1xi32>
    %c0_26 = arith.constant 0 : index
    %c0_27 = arith.constant 0 : index
    %41 = vector.load %arg11[%c0_26, %c0_27] : memref<128x128xf32, #tpu.memory_space<vmem>>, vector<128x128xf32>
    %c0_28 = arith.constant 0 : index
    %c0_29 = arith.constant 0 : index
    %42 = vector.load %arg12[%c0_28, %c0_29] : memref<8x128xf32, #tpu.memory_space<vmem>>, vector<8x128xf32>
    %43 = tpu.iota {dimensions = array<i32: 1>} : vector<64x128xi32>
    %44 = vector.broadcast %38 : vector<64x1xi32> to vector<64x128xi32>
    %45 = arith.cmpi eq, %44, %43 : vector<64x128xi32>
    %46 = arith.extui %45 : vector<64x128xi1> to vector<64x128xi32>
    %47 = arith.sitofp %46 : vector<64x128xi32> to vector<64x128xf32>
    %cst_30 = arith.constant dense<0.000000e+00> : vector<64x128xf32>
    %48 = tpu.matmul %47, %41, %cst_30 {dimension_numbers = #tpu.dot_dimension_numbers<[1], [0], [0], [1], [0, 0, 1, 1], [], []>} : vector<64x128xf32>, vector<128x128xf32>, vector<64x128xf32> -> vector<64x128xf32>
    %49 = vector.extract_strided_slice %42 {offsets = [0, 0], sizes = [1, 128], strides = [1, 1]} : vector<8x128xf32> to vector<1x128xf32>
    %50 = vector.extract_strided_slice %42 {offsets = [1, 0], sizes = [1, 128], strides = [1, 1]} : vector<8x128xf32> to vector<1x128xf32>
    %51 = vector.broadcast %49 : vector<1x128xf32> to vector<64x128xf32>
    %52 = arith.addf %48, %51 : vector<64x128xf32>
    %53 = arith.sitofp %40 : vector<64x1xi32> to vector<64x1xf32>
    %54 = arith.subf %50, %49 : vector<1x128xf32>
    %55 = vector.broadcast %53 : vector<64x1xf32> to vector<64x128xf32>
    %56 = vector.broadcast %54 : vector<1x128xf32> to vector<64x128xf32>
    %57 = arith.mulf %55, %56 : vector<64x128xf32>
    %58 = arith.addf %52, %57 : vector<64x128xf32>
    %c0_31 = arith.constant 0 : index
    %c0_32 = arith.constant 0 : index
    %c0_33 = arith.constant 0 : index
    %59 = vector.load %arg6[%c0_31, %c0_32, %c0_33] : memref<1x8x64xf32, #tpu.memory_space<vmem>>, vector<1x8x64xf32>
    %60 = vector.shape_cast %59 : vector<1x8x64xf32> to vector<8x64xf32>
    %c0_34 = arith.constant 0 : index
    %c0_35 = arith.constant 0 : index
    %61 = vector.load %arg13[%c0_34, %c0_35] : memref<128x128xf32, #tpu.memory_space<vmem>>, vector<128x128xf32>
    %c0_36 = arith.constant 0 : index
    %c0_37 = arith.constant 0 : index
    %62 = vector.load %arg14[%c0_36, %c0_37] : memref<1x128xf32, #tpu.memory_space<vmem>>, vector<1x128xf32>
    %cst_38 = arith.constant dense<0.000000e+00> : vector<8x128xf32>
    %63 = tpu.matmul %60, %58, %cst_38 {dimension_numbers = #tpu.dot_dimension_numbers<[1], [0], [0], [1], [0, 0, 1, 1], [], []>} : vector<8x64xf32>, vector<64x128xf32>, vector<8x128xf32> -> vector<8x128xf32>
    %cst_39 = arith.constant dense<0.000000e+00> : vector<8xf32>
    %64 = vector.multi_reduction <add>, %60, %cst_39 [1] : vector<8x64xf32> to vector<8xf32>
    %65 = vector.shape_cast %64 : vector<8xf32> to vector<8x1xf32>
    %cst_40 = arith.constant 1.000000e+00 : f32
    %66 = vector.broadcast %cst_40 : f32 to vector<8x1xf32>
    %67 = arith.maximumf %65, %66 : vector<8x1xf32>
    %68 = tpu.reciprocal %67 {approx = true} : vector<8x1xf32> -> vector<8x1xf32>
    %69 = vector.broadcast %68 : vector<8x1xf32> to vector<8x128xf32>
    %70 = arith.mulf %63, %69 : vector<8x128xf32>
    %cst_41 = arith.constant dense<0.000000e+00> : vector<8x128xf32>
    %71 = tpu.matmul %70, %61, %cst_41 {dimension_numbers = #tpu.dot_dimension_numbers<[1], [0], [0], [1], [0, 0, 1, 1], [], []>} : vector<8x128xf32>, vector<128x128xf32>, vector<8x128xf32> -> vector<8x128xf32>
    %72 = vector.broadcast %62 : vector<1x128xf32> to vector<8x128xf32>
    %73 = arith.addf %71, %72 : vector<8x128xf32>
    %74 = math.tanh %73 : vector<8x128xf32>
    %c0_42 = arith.constant 0 : index
    %c0_43 = arith.constant 0 : index
    %75 = vector.load %arg16[%c0_42, %c0_43] : memref<128x128xf32, #tpu.memory_space<vmem>>, vector<128x128xf32>
    %cst_44 = arith.constant dense<0.000000e+00> : vector<8x128xf32>
    %76 = tpu.matmul %74, %75, %cst_44 {dimension_numbers = #tpu.dot_dimension_numbers<[1], [0], [0], [1], [0, 0, 1, 1], [], []>} : vector<8x128xf32>, vector<128x128xf32>, vector<8x128xf32> -> vector<8x128xf32>
    %c0_45 = arith.constant 0 : index
    %c0_46 = arith.constant 0 : index
    %77 = vector.load %arg15[%c0_45, %c0_46] : memref<128x128xf32, #tpu.memory_space<vmem>>, vector<128x128xf32>
    %cst_47 = arith.constant dense<0.000000e+00> : vector<1x128xf32>
    %78 = tpu.matmul %36, %77, %cst_47 {dimension_numbers = #tpu.dot_dimension_numbers<[1], [0], [0], [1], [0, 0, 1, 1], [], []>} : vector<1x128xf32>, vector<128x128xf32>, vector<1x128xf32> -> vector<1x128xf32>
    %79 = vector.broadcast %78 : vector<1x128xf32> to vector<8x128xf32>
    %80 = arith.addf %76, %79 : vector<8x128xf32>
    %c0_48 = arith.constant 0 : index
    %c0_49 = arith.constant 0 : index
    %81 = vector.load %arg17[%c0_48, %c0_49] : memref<1x128xf32, #tpu.memory_space<vmem>>, vector<1x128xf32>
    %82 = vector.broadcast %81 : vector<1x128xf32> to vector<8x128xf32>
    %83 = arith.addf %80, %82 : vector<8x128xf32>
    %cst_50 = arith.constant 0.000000e+00 : f32
    %84 = vector.broadcast %cst_50 : f32 to vector<8x128xf32>
    %85 = arith.maximumf %83, %84 : vector<8x128xf32>
    %c0_51 = arith.constant 0 : index
    %c0_52 = arith.constant 0 : index
    %86 = vector.load %arg18[%c0_51, %c0_52] : memref<128x128xf32, #tpu.memory_space<vmem>>, vector<128x128xf32>
    %cst_53 = arith.constant dense<0.000000e+00> : vector<8x128xf32>
    %87 = tpu.matmul %85, %86, %cst_53 {dimension_numbers = #tpu.dot_dimension_numbers<[1], [0], [0], [1], [0, 0, 1, 1], [], []>} : vector<8x128xf32>, vector<128x128xf32>, vector<8x128xf32> -> vector<8x128xf32>
    %c0_54 = arith.constant 0 : index
    %c0_55 = arith.constant 0 : index
    %88 = vector.load %arg19[%c0_54, %c0_55] : memref<1x128xf32, #tpu.memory_space<vmem>>, vector<1x128xf32>
    %89 = vector.broadcast %88 : vector<1x128xf32> to vector<8x128xf32>
    %90 = arith.addf %87, %89 : vector<8x128xf32>
    %cst_56 = arith.constant 0.000000e+00 : f32
    %91 = vector.broadcast %cst_56 : f32 to vector<8x128xf32>
    %92 = arith.maximumf %90, %91 : vector<8x128xf32>
    %c0_57 = arith.constant 0 : index
    %c0_58 = arith.constant 0 : index
    %93 = vector.load %arg20[%c0_57, %c0_58] : memref<1x128xf32, #tpu.memory_space<vmem>>, vector<1x128xf32>
    %94 = vector.broadcast %93 : vector<1x128xf32> to vector<8x128xf32>
    %95 = arith.mulf %92, %94 : vector<8x128xf32>
    %cst_59 = arith.constant dense<0.000000e+00> : vector<8xf32>
    %96 = vector.multi_reduction <add>, %95, %cst_59 [1] : vector<8x128xf32> to vector<8xf32>
    %97 = vector.shape_cast %96 : vector<8xf32> to vector<8x1xf32>
    %c0_60 = arith.constant 0 : index
    %c0_61 = arith.constant 0 : index
    %98 = vector.load %arg21[%c0_60, %c0_61] : memref<1x1xf32, #tpu.memory_space<vmem>>, vector<1x1xf32>
    %99 = vector.broadcast %98 : vector<1x1xf32> to vector<8x1xf32>
    %100 = arith.addf %97, %99 : vector<8x1xf32>
    %101 = vector.shape_cast %100 : vector<8x1xf32> to vector<8x1xf32>
    %102 = vector.broadcast %101 : vector<8x1xf32> to vector<8x128xf32>
    %c0_62 = arith.constant 0 : index
    %c0_63 = arith.constant 0 : index
    %103 = vector.load %arg22[%c0_62, %c0_63] : memref<8x128xf32, #tpu.memory_space<vmem>>, vector<8x128xf32>
    tpu.vector_store %arg22[%c0_62, %c0_63], %102 {strides = array<i32>} : memref<8x128xf32, #tpu.memory_space<vmem>>, vector<8x128xf32>,
    return
  }
  func.func @transform_0(%arg0: i32) -> (i32, i32, i32) {
    %c0_i32 = arith.constant 0 : i32
    %c0_i32_0 = arith.constant 0 : i32
    %c0_i32_1 = arith.constant 0 : i32
    return %arg0, %c0_i32, %c0_i32_0 : i32, i32, i32
  }
  func.func @transform_1(%arg0: i32) -> (i32, i32, i32) {
    %c0_i32 = arith.constant 0 : i32
    %c0_i32_0 = arith.constant 0 : i32
    %c0_i32_1 = arith.constant 0 : i32
    return %arg0, %c0_i32, %c0_i32_0 : i32, i32, i32
  }
  func.func @transform_2(%arg0: i32) -> (i32, i32, i32) {
    %c0_i32 = arith.constant 0 : i32
    %c0_i32_0 = arith.constant 0 : i32
    %c0_i32_1 = arith.constant 0 : i32
    return %arg0, %c0_i32, %c0_i32_0 : i32, i32, i32
  }
  func.func @transform_3(%arg0: i32) -> (i32, i32, i32) {
    %c0_i32 = arith.constant 0 : i32
    %c0_i32_0 = arith.constant 0 : i32
    %c0_i32_1 = arith.constant 0 : i32
    return %arg0, %c0_i32, %c0_i32_0 : i32, i32, i32
  }
  func.func @transform_4(%arg0: i32) -> (i32, i32, i32) {
    %c0_i32 = arith.constant 0 : i32
    %c0_i32_0 = arith.constant 0 : i32
    %c0_i32_1 = arith.constant 0 : i32
    return %arg0, %c0_i32, %c0_i32_0 : i32, i32, i32
  }
  func.func @transform_5(%arg0: i32) -> (i32, i32, i32) {
    %c0_i32 = arith.constant 0 : i32
    %c0_i32_0 = arith.constant 0 : i32
    %c0_i32_1 = arith.constant 0 : i32
    return %arg0, %c0_i32, %c0_i32_0 : i32, i32, i32
  }
  func.func @transform_6(%arg0: i32) -> (i32, i32) {
    %c0_i32 = arith.constant 0 : i32
    %c0_i32_0 = arith.constant 0 : i32
    %c0_i32_1 = arith.constant 0 : i32
    return %c0_i32, %c0_i32_0 : i32, i32
  }
  func.func @transform_7(%arg0: i32) -> (i32, i32) {
    %c0_i32 = arith.constant 0 : i32
    %c0_i32_0 = arith.constant 0 : i32
    %c0_i32_1 = arith.constant 0 : i32
    return %c0_i32, %c0_i32_0 : i32, i32
  }
  func.func @transform_8(%arg0: i32) -> (i32, i32) {
    %c0_i32 = arith.constant 0 : i32
    %c0_i32_0 = arith.constant 0 : i32
    %c0_i32_1 = arith.constant 0 : i32
    return %c0_i32, %c0_i32_0 : i32, i32
  }
  func.func @transform_9(%arg0: i32) -> (i32, i32) {
    %c0_i32 = arith.constant 0 : i32
    %c0_i32_0 = arith.constant 0 : i32
    %c0_i32_1 = arith.constant 0 : i32
    return %c0_i32, %c0_i32_0 : i32, i32
  }
  func.func @transform_10(%arg0: i32) -> (i32, i32) {
    %c0_i32 = arith.constant 0 : i32
    %c0_i32_0 = arith.constant 0 : i32
    %c0_i32_1 = arith.constant 0 : i32
    return %c0_i32, %c0_i32_0 : i32, i32
  }
  func.func @transform_11(%arg0: i32) -> (i32, i32) {
    %c0_i32 = arith.constant 0 : i32
    %c0_i32_0 = arith.constant 0 : i32
    %c0_i32_1 = arith.constant 0 : i32
    return %c0_i32, %c0_i32_0 : i32, i32
  }
  func.func @transform_12(%arg0: i32) -> (i32, i32) {
    %c0_i32 = arith.constant 0 : i32
    %c0_i32_0 = arith.constant 0 : i32
    %c0_i32_1 = arith.constant 0 : i32
    return %c0_i32, %c0_i32_0 : i32, i32
  }
  func.func @transform_13(%arg0: i32) -> (i32, i32) {
    %c0_i32 = arith.constant 0 : i32
    %c0_i32_0 = arith.constant 0 : i32
    %c0_i32_1 = arith.constant 0 : i32
    return %c0_i32, %c0_i32_0 : i32, i32
  }
  func.func @transform_14(%arg0: i32) -> (i32, i32) {
    %c0_i32 = arith.constant 0 : i32
    %c0_i32_0 = arith.constant 0 : i32
    %c0_i32_1 = arith.constant 0 : i32
    return %c0_i32, %c0_i32_0 : i32, i32
  }
  func.func @transform_15(%arg0: i32) -> (i32, i32) {
    %c0_i32 = arith.constant 0 : i32
    %c0_i32_0 = arith.constant 0 : i32
    %c0_i32_1 = arith.constant 0 : i32
    return %c0_i32, %c0_i32_0 : i32, i32
  }
  func.func @transform_16(%arg0: i32) -> (i32, i32) {
    %c0_i32 = arith.constant 0 : i32
    %c0_i32_0 = arith.constant 0 : i32
    %c0_i32_1 = arith.constant 0 : i32
    return %c0_i32, %c0_i32_0 : i32, i32
  }
  func.func @transform_17(%arg0: i32) -> (i32, i32) {
    %c0_i32 = arith.constant 0 : i32
    %c0_i32_0 = arith.constant 0 : i32
    %c0_i32_1 = arith.constant 0 : i32
    return %c0_i32, %c0_i32_0 : i32, i32
  }
  func.func @transform_18(%arg0: i32) -> (i32, i32) {
    %c0_i32 = arith.constant 0 : i32
    %c0_i32_0 = arith.constant 0 : i32
    %c0_i32_1 = arith.constant 0 : i32
    return %c0_i32, %c0_i32_0 : i32, i32
  }
  func.func @transform_19(%arg0: i32) -> (i32, i32) {
    %c0_i32 = arith.constant 0 : i32
    %c0_i32_0 = arith.constant 0 : i32
    %c0_i32_1 = arith.constant 0 : i32
    return %c0_i32, %c0_i32_0 : i32, i32
  }
  func.func @transform_20(%arg0: i32) -> (i32, i32) {
    %c0_i32 = arith.constant 0 : i32
    %c0_i32_0 = arith.constant 0 : i32
    %c0_i32_1 = arith.constant 0 : i32
    return %c0_i32, %c0_i32_0 : i32, i32
  }
  func.func @transform_21(%arg0: i32) -> (i32, i32) {
    %c0_i32 = arith.constant 0 : i32
    %c0_i32_0 = arith.constant 0 : i32
    return %arg0, %c0_i32 : i32, i32
  }
}

</mosaic_0001>

<llo_original>
// kernel: squeeze.1
$region0: #{squeeze.1}
  %s0 = inlined_call_operand.vmem [shape: f32[16], index: 0, kind: input, shape index: {}]
  %s1 = inlined_call_operand.hbm [shape: f32[2,8], index: 1, kind: output, shape index: {}]
  $region1: #{squeeze.1} parent=0
    #allocation0 [shape = 'u8[1024]{0}', space=vmem, size = 0x400, scoped, tag = 'operand span for operand 1']
    #allocation1 [shape = 's32[1]{0}', space=sflag, size = 0x4, scoped, tag = 'scoped memory for squeeze.1']
    #allocation2 [shape = 'u8[4096]{0}', space=vmem, size = 0x1000, scoped, tag = 'scoped mem for output reshape']
    #allocation3 [shape = 'u8[4096]{0}', space=vmem, size = 0x1000, scoped, tag = 'scoped mem for input reshape']
    %2 = vsyncpa [#allocation1], 0
    %s4 = ssub.s32 2, 1
    %v5 = vld [vmem:[%s0] sm:%s4]
    %6 = vst [vmem:[#allocation3] sm:%s4] %v5
    %v7 = vld [vmem:[#allocation3] sm:$0x1]
    %vm8 = vcmask 64512
    %9 = vst.msk [vmem:[#allocation2] sm:$0x1] %vm8, %v7
    %v10 = vld [vmem:[#allocation3] sm:$0x1]
    %11 = vrot.lane.b32.xlu0 %v10, 120
    %v12 = vpop.permute.xlu0 %11
    %vm13 = vcmask 64512
    %s14 = scalar_lea.vmem [#allocation2], 1
    %15 = vst.msk [vmem:[%s14] sm:$0x1] %vm13, %v12
    %s17 = ssub.s32 4, 1
    %v18 = vld [vmem:[#allocation2] sm:%s17]
    %s20 = ssub.s32 4, 1
    %21 = vst [vmem:[#allocation0] sm:%s20] %v18
    %23 = vsyncadd [#allocation1], 0
    %s25 = sshll.u32 [#allocation0], 4
    %s26 = int_to_ptr.vmem [resolvable:$true] %s25
    %s27 = sshll.u32 %s1, 4
    %s28 = int_to_ptr.hbm [resolvable:$true] %s27
    %30 = dma.vmem_to_hbm [thread:$0]  %s26, 32, %s28, [#allocation1]
    %32 = dma.done [#allocation1], 32
    %33 = vsyncpa [#allocation1], 1

// kernel: feed_forward_retriever_forward.1
$region0: #{feed_forward_retriever_forward.1}
  #allocation0 [shape = 'u32[]', space=smem, size = 0x4, offset = 0x4, fixed_abs, tag = 'smem constant byte address 0x4 - core index']
  #allocation1 [shape = 'u32[72,128]{1,0:T(1,128)}', space=vmem, size = 0x9000, scoped, tag = 'internal scratch']
  #allocation2 [shape = 'f32[1,1]{1,0:T(1,128)S(1)}', space=vmem, size = 0x200, scoped, tag = 'scoped memory for feed_forward_retriever_forward.1']
  %s0 = inlined_call_operand.vmem [shape: s32[2,8,1], index: 0, kind: input, shape index: {}]
  %s1 = inlined_call_operand.vmem [shape: s32[2,8,1], index: 1, kind: input, shape index: {}]
  %s2 = inlined_call_operand.vmem [shape: f32[2,1,8], index: 2, kind: input, shape index: {}]
  %s3 = inlined_call_operand.vmem [shape: s32[2,64,1], index: 3, kind: input, shape index: {}]
  %s4 = inlined_call_operand.vmem [shape: s32[2,64,1], index: 4, kind: input, shape index: {}]
  %s5 = inlined_call_operand.vmem [shape: f32[2,8,64], index: 5, kind: input, shape index: {}]
  %s6 = inlined_call_operand.vmem [shape: f32[128,128], index: 6, kind: input, shape index: {}]
  %s7 = inlined_call_operand.vmem [shape: f32[8,128], index: 7, kind: input, shape index: {}]
  %s8 = inlined_call_operand.vmem [shape: f32[128,128], index: 8, kind: input, shape index: {}]
  %s9 = inlined_call_operand.vmem [shape: f32[1,128], index: 9, kind: input, shape index: {}]
  %s10 = inlined_call_operand.vmem [shape: f32[128,128], index: 10, kind: input, shape index: {}]
  %s11 = inlined_call_operand.vmem [shape: f32[8,128], index: 11, kind: input, shape index: {}]
  %s12 = inlined_call_operand.vmem [shape: f32[128,128], index: 12, kind: input, shape index: {}]
  %s13 = inlined_call_operand.vmem [shape: f32[1,128], index: 13, kind: input, shape index: {}]
  %s14 = inlined_call_operand.vmem [shape: f32[128,128], index: 14, kind: input, shape index: {}]
  %s15 = inlined_call_operand.vmem [shape: f32[128,128], index: 15, kind: input, shape index: {}]
  %s16 = inlined_call_operand.vmem [shape: f32[1,128], index: 16, kind: input, shape index: {}]
  %s17 = inlined_call_operand.hbm [shape: f32[128,128], index: 17, kind: input, shape index: {}]
  %s18 = inlined_call_operand.vmem [shape: f32[1,128], index: 18, kind: input, shape index: {}]
  %s19 = inlined_call_operand.vmem [shape: f32[1,128], index: 19, kind: input, shape index: {}]
  %s20 = inlined_call_operand.<no memory space> [shape: f32[1,1], index: 20, kind: input, shape index: {}]
  %s21 = inlined_call_operand.vmem [shape: f32[16,128], index: 21, kind: output, shape index: {}]
  %s22 = sld [smem:[#allocation0]]
  $region121: #{feed_forward_retriever_forward.1} parent=0
    _
  %s24 = ssub.s32 1, %s22
  %s25 = scalar_select 0, %s24, %s22
  %v26 = vstv %s20
  %27 = vst [vmem:[#allocation2] sm:$0x1] %v26
  $region1: #{feed_forward_retriever_forward.1} parent=0
    #allocation3 [shape = 'u8[65536]{0}', space=vmem, size = 0x10000, scoped, tag = 'input window, operand 17, single buffered']
    #allocation4 [shape = 's32[2]{0}', space=sflag, size = 0x8, scoped, tag = 'scoped memory for feed_forward_retriever_forward.1']
    %28 = vsyncpa [#allocation4], 0
    loop: start=0, step=1, limit=4
    $region2: #{feed_forward_retriever_forward.1} parent=1 // loop_pre_header
      _
    $region3: #{feed_forward_retriever_forward.1} parent=1 // loop_header
      %s30 = sphi 0, %s34
      %p31 = scmp.ge.s32.totalorder %s30, 4
      %s40 = sphi 0, %s42
      %s43 = sphi 0, %s40
      %s44 = sphi 0, %s43
      %s60 = sphi 0, %s44
      %s66 = sphi 0, %s68
      %s69 = sphi 0, %s66
      %s70 = sphi 0, %s69
      %s86 = sphi 0, %s70
      %s92 = sphi 0, %s94
      %s95 = sphi 0, %s92
      %s96 = sphi 0, %s95
      %s112 = sphi 0, %s96
      %s118 = sphi 0, %s120
      %s121 = sphi 0, %s118
      %s122 = sphi 0, %s121
      %s138 = sphi 0, %s122
      %s144 = sphi 0, %s146
      %s147 = sphi 0, %s144
      %s148 = sphi 0, %s147
      %s164 = sphi 0, %s148
      %s170 = sphi 0, %s172
      %s173 = sphi 0, %s170
      %s174 = sphi 0, %s173
      %s190 = sphi 0, %s174
      %s194 = sphi 0, %s194
      %s196 = sphi 0, %s194
      %s197 = sphi 0, %s196
      %s211 = sphi 0, %s197
      %s215 = sphi 0, %s215
      %s217 = sphi 0, %s215
      %s218 = sphi 0, %s217
      %s232 = sphi 0, %s218
      %s236 = sphi 0, %s236
      %s238 = sphi 0, %s236
      %s239 = sphi 0, %s238
      %s253 = sphi 0, %s239
      %s257 = sphi 0, %s257
      %s259 = sphi 0, %s257
      %s260 = sphi 0, %s259
      %s274 = sphi 0, %s260
      %s278 = sphi 0, %s278
      %s280 = sphi 0, %s278
      %s281 = sphi 0, %s280
      %s295 = sphi 0, %s281
      %s299 = sphi 0, %s299
      %s301 = sphi 0, %s299
      %s302 = sphi 0, %s301
      %s316 = sphi 0, %s302
      %s320 = sphi 0, %s320
      %s322 = sphi 0, %s320
      %s323 = sphi 0, %s322
      %s337 = sphi 0, %s323
      %s341 = sphi 0, %s341
      %s343 = sphi 0, %s341
      %s344 = sphi 0, %s343
      %s358 = sphi 0, %s344
      %s362 = sphi 0, %s362
      %s364 = sphi 0, %s362
      %s365 = sphi 0, %s364
      %s379 = sphi 0, %s365
      %s383 = sphi 0, %s383
      %s385 = sphi 0, %s383
      %s386 = sphi 0, %s385
      %s400 = sphi 0, %s386
      %s404 = sphi 0, %s404
      %s406 = sphi 0, %s404
      %s407 = sphi 0, %s406
      %s421 = sphi 0, %s407
      %s425 = sphi 0, %s425
      %s427 = sphi 0, %s425
      %s428 = sphi 0, %s427
      %s442 = sphi 0, %s428
      %s446 = sphi 0, %s446
      %s448 = sphi 0, %s446
      %s449 = sphi 0, %s448
      %s463 = sphi 0, %s449
      %s467 = sphi 0, %s467
      %s469 = sphi 0, %s467
      %s470 = sphi 0, %s469
      %s484 = sphi 0, %s470
      %s488 = sphi 0, %s488
      %s490 = sphi 0, %s488
      %s491 = sphi 0, %s490
      %s505 = sphi 0, %s491
      %s511 = sphi 0, %s513
      %s514 = sphi 0, %s511
      %s515 = sphi 0, %s514
      %s531 = sphi 0, %s515
    $region4: #{feed_forward_retriever_forward.1} parent=1 // loop_header_branch
      %33 = sbr.rel (%p31) target = $region8
    $region5: #{feed_forward_retriever_forward.1} parent=1 // loop_body
      %s35 = ssub.s32 %s30, 1
      %s36 = ssub.s32 %s30, 2
      %s37 = sadd.s32 %s30, 1
      %s38 = ssub.s32 %s30, %s37
      %p39 = scmp.eq.s32.totalorder %s38, 0
      %s41 = sadd.s32 %s40, 1
      %s42 = scalar_select %p39, %s40, %s41
      %p45 = pneg %p39
      %p46 = scmp.eq.s32.totalorder %s30, 1
      %p47 = por %p45, %p46
      %p48 = scmp.ne.s32.totalorder %s40, %s43
      %p49 = scmp.eq.s32.totalorder %s30, 0
      %p50 = por %p48, %p49
      %p51 = scmp.ne.s32.totalorder %s40, %s43
      %p52 = scmp.eq.s32.totalorder %s35, 1
      %p53 = por %p51, %p52
      %p54 = scmp.ne.s32.totalorder %s43, %s44
      %p55 = scmp.eq.s32.totalorder %s35, 0
      %p56 = por %p54, %p55
      %p57 = scmp.ne.s32.totalorder %s43, %s44
      %p58 = scmp.eq.s32.totalorder %s36, 1
      %p59 = por %p57, %p58
      %p61 = scmp.ne.s32.totalorder %s44, %s60
      %p62 = scmp.eq.s32.totalorder %s36, 0
      %p63 = por %p61, %p62
      %s64 = ssub.s32 %s30, %s37
      %p65 = scmp.eq.s32.totalorder %s64, 0
      %s67 = sadd.s32 %s66, 1
      %s68 = scalar_select %p65, %s66, %s67
      %p71 = pneg %p65
      %p72 = scmp.eq.s32.totalorder %s30, 1
      %p73 = por %p71, %p72
      %p74 = scmp.ne.s32.totalorder %s66, %s69
      %p75 = scmp.eq.s32.totalorder %s30, 0
      %p76 = por %p74, %p75
      %p77 = scmp.ne.s32.totalorder %s66, %s69
      %p78 = scmp.eq.s32.totalorder %s35, 1
      %p79 = por %p77, %p78
      %p80 = scmp.ne.s32.totalorder %s69, %s70
      %p81 = scmp.eq.s32.totalorder %s35, 0
      %p82 = por %p80, %p81
      %p83 = scmp.ne.s32.totalorder %s69, %s70
      %p84 = scmp.eq.s32.totalorder %s36, 1
      %p85 = por %p83, %p84
      %p87 = scmp.ne.s32.totalorder %s70, %s86
      %p88 = scmp.eq.s32.totalorder %s36, 0
      %p89 = por %p87, %p88
      %s90 = ssub.s32 %s30, %s37
      %p91 = scmp.eq.s32.totalorder %s90, 0
      %s93 = sadd.s32 %s92, 1
      %s94 = scalar_select %p91, %s92, %s93
      %p97 = pneg %p91
      %p98 = scmp.eq.s32.totalorder %s30, 1
      %p99 = por %p97, %p98
      %p100 = scmp.ne.s32.totalorder %s92, %s95
      %p101 = scmp.eq.s32.totalorder %s30, 0
      %p102 = por %p100, %p101
      %p103 = scmp.ne.s32.totalorder %s92, %s95
      %p104 = scmp.eq.s32.totalorder %s35, 1
      %p105 = por %p103, %p104
      %p106 = scmp.ne.s32.totalorder %s95, %s96
      %p107 = scmp.eq.s32.totalorder %s35, 0
      %p108 = por %p106, %p107
      %p109 = scmp.ne.s32.totalorder %s95, %s96
      %p110 = scmp.eq.s32.totalorder %s36, 1
      %p111 = por %p109, %p110
      %p113 = scmp.ne.s32.totalorder %s96, %s112
      %p114 = scmp.eq.s32.totalorder %s36, 0
      %p115 = por %p113, %p114
      %s116 = ssub.s32 %s30, %s37
      %p117 = scmp.eq.s32.totalorder %s116, 0
      %s119 = sadd.s32 %s118, 1
      %s120 = scalar_select %p117, %s118, %s119
      %p123 = pneg %p117
      %p124 = scmp.eq.s32.totalorder %s30, 1
      %p125 = por %p123, %p124
      %p126 = scmp.ne.s32.totalorder %s118, %s121
      %p127 = scmp.eq.s32.totalorder %s30, 0
      %p128 = por %p126, %p127
      %p129 = scmp.ne.s32.totalorder %s118, %s121
      %p130 = scmp.eq.s32.totalorder %s35, 1
      %p131 = por %p129, %p130
      %p132 = scmp.ne.s32.totalorder %s121, %s122
      %p133 = scmp.eq.s32.totalorder %s35, 0
      %p134 = por %p132, %p133
      %p135 = scmp.ne.s32.totalorder %s121, %s122
      %p136 = scmp.eq.s32.totalorder %s36, 1
      %p137 = por %p135, %p136
      %p139 = scmp.ne.s32.totalorder %s122, %s138
      %p140 = scmp.eq.s32.totalorder %s36, 0
      %p141 = por %p139, %p140
      %s142 = ssub.s32 %s30, %s37
      %p143 = scmp.eq.s32.totalorder %s142, 0
      %s145 = sadd.s32 %s144, 1
      %s146 = scalar_select %p143, %s144, %s145
      %p149 = pneg %p143
      %p150 = scmp.eq.s32.totalorder %s30, 1
      %p151 = por %p149, %p150
      %p152 = scmp.ne.s32.totalorder %s144, %s147
      %p153 = scmp.eq.s32.totalorder %s30, 0
      %p154 = por %p152, %p153
      %p155 = scmp.ne.s32.totalorder %s144, %s147
      %p156 = scmp.eq.s32.totalorder %s35, 1
      %p157 = por %p155, %p156
      %p158 = scmp.ne.s32.totalorder %s147, %s148
      %p159 = scmp.eq.s32.totalorder %s35, 0
      %p160 = por %p158, %p159
      %p161 = scmp.ne.s32.totalorder %s147, %s148
      %p162 = scmp.eq.s32.totalorder %s36, 1
      %p163 = por %p161, %p162
      %p165 = scmp.ne.s32.totalorder %s148, %s164
      %p166 = scmp.eq.s32.totalorder %s36, 0
      %p167 = por %p165, %p166
      %s168 = ssub.s32 %s30, %s37
      %p169 = scmp.eq.s32.totalorder %s168, 0
      %s171 = sadd.s32 %s170, 1
      %s172 = scalar_select %p169, %s170, %s171
      %p175 = pneg %p169
      %p176 = scmp.eq.s32.totalorder %s30, 1
      %p177 = por %p175, %p176
      %p178 = scmp.ne.s32.totalorder %s170, %s173
      %p179 = scmp.eq.s32.totalorder %s30, 0
      %p180 = por %p178, %p179
      %p181 = scmp.ne.s32.totalorder %s170, %s173
      %p182 = scmp.eq.s32.totalorder %s35, 1
      %p183 = por %p181, %p182
      %p184 = scmp.ne.s32.totalorder %s173, %s174
      %p185 = scmp.eq.s32.totalorder %s35, 0
      %p186 = por %p184, %p185
      %p187 = scmp.ne.s32.totalorder %s173, %s174
      %p188 = scmp.eq.s32.totalorder %s36, 1
      %p189 = por %p187, %p188
      %p191 = scmp.ne.s32.totalorder %s174, %s190
      %p192 = scmp.eq.s32.totalorder %s36, 0
      %p193 = por %p191, %p192
      %s195 = sadd.s32 %s194, 1
      %p198 = scmp.eq.s32.totalorder %s30, 1
      %p199 = scmp.ne.s32.totalorder %s194, %s196
      %p200 = scmp.eq.s32.totalorder %s30, 0
      %p201 = por %p199, %p200
      %p202 = scmp.ne.s32.totalorder %s194, %s196
      %p203 = scmp.eq.s32.totalorder %s35, 1
      %p204 = por %p202, %p203
      %p205 = scmp.ne.s32.totalorder %s196, %s197
      %p206 = scmp.eq.s32.totalorder %s35, 0
      %p207 = por %p205, %p206
      %p208 = scmp.ne.s32.totalorder %s196, %s197
      %p209 = scmp.eq.s32.totalorder %s36, 1
      %p210 = por %p208, %p209
      %p212 = scmp.ne.s32.totalorder %s197, %s211
      %p213 = scmp.eq.s32.totalorder %s36, 0
      %p214 = por %p212, %p213
      %s216 = sadd.s32 %s215, 1
      %p219 = scmp.eq.s32.totalorder %s30, 1
      %p220 = scmp.ne.s32.totalorder %s215, %s217
      %p221 = scmp.eq.s32.totalorder %s30, 0
      %p222 = por %p220, %p221
      %p223 = scmp.ne.s32.totalorder %s215, %s217
      %p224 = scmp.eq.s32.totalorder %s35, 1
      %p225 = por %p223, %p224
      %p226 = scmp.ne.s32.totalorder %s217, %s218
      %p227 = scmp.eq.s32.totalorder %s35, 0
      %p228 = por %p226, %p227
      %p229 = scmp.ne.s32.totalorder %s217, %s218
      %p230 = scmp.eq.s32.totalorder %s36, 1
      %p231 = por %p229, %p230
      %p233 = scmp.ne.s32.totalorder %s218, %s232
      %p234 = scmp.eq.s32.totalorder %s36, 0
      %p235 = por %p233, %p234
      %s237 = sadd.s32 %s236, 1
      %p240 = scmp.eq.s32.totalorder %s30, 1
      %p241 = scmp.ne.s32.totalorder %s236, %s238
      %p242 = scmp.eq.s32.totalorder %s30, 0
      %p243 = por %p241, %p242
      %p244 = scmp.ne.s32.totalorder %s236, %s238
      %p245 = scmp.eq.s32.totalorder %s35, 1
      %p246 = por %p244, %p245
      %p247 = scmp.ne.s32.totalorder %s238, %s239
      %p248 = scmp.eq.s32.totalorder %s35, 0
      %p249 = por %p247, %p248
      %p250 = scmp.ne.s32.totalorder %s238, %s239
      %p251 = scmp.eq.s32.totalorder %s36, 1
      %p252 = por %p250, %p251
      %p254 = scmp.ne.s32.totalorder %s239, %s253
      %p255 = scmp.eq.s32.totalorder %s36, 0
      %p256 = por %p254, %p255
      %s258 = sadd.s32 %s257, 1
      %p261 = scmp.eq.s32.totalorder %s30, 1
      %p262 = scmp.ne.s32.totalorder %s257, %s259
      %p263 = scmp.eq.s32.totalorder %s30, 0
      %p264 = por %p262, %p263
      %p265 = scmp.ne.s32.totalorder %s257, %s259
      %p266 = scmp.eq.s32.totalorder %s35, 1
      %p267 = por %p265, %p266
      %p268 = scmp.ne.s32.totalorder %s259, %s260
      %p269 = scmp.eq.s32.totalorder %s35, 0
      %p270 = por %p268, %p269
      %p271 = scmp.ne.s32.totalorder %s259, %s260
      %p272 = scmp.eq.s32.totalorder %s36, 1
      %p273 = por %p271, %p272
      %p275 = scmp.ne.s32.totalorder %s260, %s274
      %p276 = scmp.eq.s32.totalorder %s36, 0
      %p277 = por %p275, %p276
      %s279 = sadd.s32 %s278, 1
      %p282 = scmp.eq.s32.totalorder %s30, 1
      %p283 = scmp.ne.s32.totalorder %s278, %s280
      %p284 = scmp.eq.s32.totalorder %s30, 0
      %p285 = por %p283, %p284
      %p286 = scmp.ne.s32.totalorder %s278, %s280
      %p287 = scmp.eq.s32.totalorder %s35, 1
      %p288 = por %p286, %p287
      %p289 = scmp.ne.s32.totalorder %s280, %s281
      %p290 = scmp.eq.s32.totalorder %s35, 0
      %p291 = por %p289, %p290
      %p292 = scmp.ne.s32.totalorder %s280, %s281
      %p293 = scmp.eq.s32.totalorder %s36, 1
      %p294 = por %p292, %p293
      %p296 = scmp.ne.s32.totalorder %s281, %s295
      %p297 = scmp.eq.s32.totalorder %s36, 0
      %p298 = por %p296, %p297
      %s300 = sadd.s32 %s299, 1
      %p303 = scmp.eq.s32.totalorder %s30, 1
      %p304 = scmp.ne.s32.totalorder %s299, %s301
      %p305 = scmp.eq.s32.totalorder %s30, 0
      %p306 = por %p304, %p305
      %p307 = scmp.ne.s32.totalorder %s299, %s301
      %p308 = scmp.eq.s32.totalorder %s35, 1
      %p309 = por %p307, %p308
      %p310 = scmp.ne.s32.totalorder %s301, %s302
      %p311 = scmp.eq.s32.totalorder %s35, 0
      %p312 = por %p310, %p311
      %p313 = scmp.ne.s32.totalorder %s301, %s302
      %p314 = scmp.eq.s32.totalorder %s36, 1
      %p315 = por %p313, %p314
      %p317 = scmp.ne.s32.totalorder %s302, %s316
      %p318 = scmp.eq.s32.totalorder %s36, 0
      %p319 = por %p317, %p318
      %s321 = sadd.s32 %s320, 1
      %p324 = scmp.eq.s32.totalorder %s30, 1
      %p325 = scmp.ne.s32.totalorder %s320, %s322
      %p326 = scmp.eq.s32.totalorder %s30, 0
      %p327 = por %p325, %p326
      %p328 = scmp.ne.s32.totalorder %s320, %s322
      %p329 = scmp.eq.s32.totalorder %s35, 1
      %p330 = por %p328, %p329
      %p331 = scmp.ne.s32.totalorder %s322, %s323
      %p332 = scmp.eq.s32.totalorder %s35, 0
      %p333 = por %p331, %p332
      %p334 = scmp.ne.s32.totalorder %s322, %s323
      %p335 = scmp.eq.s32.totalorder %s36, 1
      %p336 = por %p334, %p335
      %p338 = scmp.ne.s32.totalorder %s323, %s337
      %p339 = scmp.eq.s32.totalorder %s36, 0
      %p340 = por %p338, %p339
      %s342 = sadd.s32 %s341, 1
      %p345 = scmp.eq.s32.totalorder %s30, 1
      %p346 = scmp.ne.s32.totalorder %s341, %s343
      %p347 = scmp.eq.s32.totalorder %s30, 0
      %p348 = por %p346, %p347
      %p349 = scmp.ne.s32.totalorder %s341, %s343
      %p350 = scmp.eq.s32.totalorder %s35, 1
      %p351 = por %p349, %p350
      %p352 = scmp.ne.s32.totalorder %s343, %s344
      %p353 = scmp.eq.s32.totalorder %s35, 0
      %p354 = por %p352, %p353
      %p355 = scmp.ne.s32.totalorder %s343, %s344
      %p356 = scmp.eq.s32.totalorder %s36, 1
      %p357 = por %p355, %p356
      %p359 = scmp.ne.s32.totalorder %s344, %s358
      %p360 = scmp.eq.s32.totalorder %s36, 0
      %p361 = por %p359, %p360
      %s363 = sadd.s32 %s362, 1
      %p366 = scmp.eq.s32.totalorder %s30, 1
      %p367 = scmp.ne.s32.totalorder %s362, %s364
      %p368 = scmp.eq.s32.totalorder %s30, 0
      %p369 = por %p367, %p368
      %p370 = scmp.ne.s32.totalorder %s362, %s364
      %p371 = scmp.eq.s32.totalorder %s35, 1
      %p372 = por %p370, %p371
      %p373 = scmp.ne.s32.totalorder %s364, %s365
      %p374 = scmp.eq.s32.totalorder %s35, 0
      %p375 = por %p373, %p374
      %p376 = scmp.ne.s32.totalorder %s364, %s365
      %p377 = scmp.eq.s32.totalorder %s36, 1
      %p378 = por %p376, %p377
      %p380 = scmp.ne.s32.totalorder %s365, %s379
      %p381 = scmp.eq.s32.totalorder %s36, 0
      %p382 = por %p380, %p381
      %s384 = sadd.s32 %s383, 1
      %p387 = scmp.eq.s32.totalorder %s30, 1
      %p388 = scmp.ne.s32.totalorder %s383, %s385
      %p389 = scmp.eq.s32.totalorder %s30, 0
      %p390 = por %p388, %p389
      %p391 = scmp.ne.s32.totalorder %s383, %s385
      %p392 = scmp.eq.s32.totalorder %s35, 1
      %p393 = por %p391, %p392
      %p394 = scmp.ne.s32.totalorder %s385, %s386
      %p395 = scmp.eq.s32.totalorder %s35, 0
      %p396 = por %p394, %p395
      %p397 = scmp.ne.s32.totalorder %s385, %s386
      %p398 = scmp.eq.s32.totalorder %s36, 1
      %p399 = por %p397, %p398
      %p401 = scmp.ne.s32.totalorder %s386, %s400
      %p402 = scmp.eq.s32.totalorder %s36, 0
      %p403 = por %p401, %p402
      %s405 = sadd.s32 %s404, 1
      %p408 = scmp.eq.s32.totalorder %s30, 1
      %p409 = scmp.ne.s32.totalorder %s404, %s406
      %p410 = scmp.eq.s32.totalorder %s30, 0
      %p411 = por %p409, %p410
      %p412 = scmp.ne.s32.totalorder %s404, %s406
      %p413 = scmp.eq.s32.totalorder %s35, 1
      %p414 = por %p412, %p413
      %p415 = scmp.ne.s32.totalorder %s406, %s407
      %p416 = scmp.eq.s32.totalorder %s35, 0
      %p417 = por %p415, %p416
      %p418 = scmp.ne.s32.totalorder %s406, %s407
      %p419 = scmp.eq.s32.totalorder %s36, 1
      %p420 = por %p418, %p419
      %p422 = scmp.ne.s32.totalorder %s407, %s421
      %p423 = scmp.eq.s32.totalorder %s36, 0
      %p424 = por %p422, %p423
      %s426 = sadd.s32 %s425, 1
      %p429 = scmp.eq.s32.totalorder %s30, 1
      %p430 = scmp.ne.s32.totalorder %s425, %s427
      %p431 = scmp.eq.s32.totalorder %s30, 0
      %p432 = por %p430, %p431
      %p433 = scmp.ne.s32.totalorder %s425, %s427
      %p434 = scmp.eq.s32.totalorder %s35, 1
      %p435 = por %p433, %p434
      %p436 = scmp.ne.s32.totalorder %s427, %s428
      %p437 = scmp.eq.s32.totalorder %s35, 0
      %p438 = por %p436, %p437
      %p439 = scmp.ne.s32.totalorder %s427, %s428
      %p440 = scmp.eq.s32.totalorder %s36, 1
      %p441 = por %p439, %p440
      %p443 = scmp.ne.s32.totalorder %s428, %s442
      %p444 = scmp.eq.s32.totalorder %s36, 0
      %p445 = por %p443, %p444
      %s447 = sadd.s32 %s446, 1
      %p450 = scmp.eq.s32.totalorder %s30, 1
      %p451 = scmp.ne.s32.totalorder %s446, %s448
      %p452 = scmp.eq.s32.totalorder %s30, 0
      %p453 = por %p451, %p452
      %p454 = scmp.ne.s32.totalorder %s446, %s448
      %p455 = scmp.eq.s32.totalorder %s35, 1
      %p456 = por %p454, %p455
      %p457 = scmp.ne.s32.totalorder %s448, %s449
      %p458 = scmp.eq.s32.totalorder %s35, 0
      %p459 = por %p457, %p458
      %p460 = scmp.ne.s32.totalorder %s448, %s449
      %p461 = scmp.eq.s32.totalorder %s36, 1
      %p462 = por %p460, %p461
      %p464 = scmp.ne.s32.totalorder %s449, %s463
      %p465 = scmp.eq.s32.totalorder %s36, 0
      %p466 = por %p464, %p465
      %s468 = sadd.s32 %s467, 1
      %p471 = scmp.eq.s32.totalorder %s30, 1
      %p472 = scmp.ne.s32.totalorder %s467, %s469
      %p473 = scmp.eq.s32.totalorder %s30, 0
      %p474 = por %p472, %p473
      %p475 = scmp.ne.s32.totalorder %s467, %s469
      %p476 = scmp.eq.s32.totalorder %s35, 1
      %p477 = por %p475, %p476
      %p478 = scmp.ne.s32.totalorder %s469, %s470
      %p479 = scmp.eq.s32.totalorder %s35, 0
      %p480 = por %p478, %p479
      %p481 = scmp.ne.s32.totalorder %s469, %s470
      %p482 = scmp.eq.s32.totalorder %s36, 1
      %p483 = por %p481, %p482
      %p485 = scmp.ne.s32.totalorder %s470, %s484
      %p486 = scmp.eq.s32.totalorder %s36, 0
      %p487 = por %p485, %p486
      %s489 = sadd.s32 %s488, 1
      %p492 = scmp.eq.s32.totalorder %s30, 1
      %p493 = scmp.ne.s32.totalorder %s488, %s490
      %p494 = scmp.eq.s32.totalorder %s30, 0
      %p495 = por %p493, %p494
      %p496 = scmp.ne.s32.totalorder %s488, %s490
      %p497 = scmp.eq.s32.totalorder %s35, 1
      %p498 = por %p496, %p497
      %p499 = scmp.ne.s32.totalorder %s490, %s491
      %p500 = scmp.eq.s32.totalorder %s35, 0
      %p501 = por %p499, %p500
      %p502 = scmp.ne.s32.totalorder %s490, %s491
      %p503 = scmp.eq.s32.totalorder %s36, 1
      %p504 = por %p502, %p503
      %p506 = scmp.ne.s32.totalorder %s491, %s505
      %p507 = scmp.eq.s32.totalorder %s36, 0
      %p508 = por %p506, %p507
      %s509 = ssub.s32 %s30, %s37
      %p510 = scmp.eq.s32.totalorder %s509, 0
      %s512 = sadd.s32 %s511, 1
      %s513 = scalar_select %p510, %s511, %s512
      %p516 = pneg %p510
      %p517 = scmp.eq.s32.totalorder %s30, 1
      %p518 = por %p516, %p517
      %p519 = scmp.ne.s32.totalorder %s511, %s514
      %p520 = scmp.eq.s32.totalorder %s30, 0
      %p521 = por %p519, %p520
      %p522 = scmp.ne.s32.totalorder %s511, %s514
      %p523 = scmp.eq.s32.totalorder %s35, 1
      %p524 = por %p522, %p523
      %p525 = scmp.ne.s32.totalorder %s514, %s515
      %p526 = scmp.eq.s32.totalorder %s35, 0
      %p527 = por %p525, %p526
      %p528 = scmp.ne.s32.totalorder %s514, %s515
      %p529 = scmp.eq.s32.totalorder %s36, 1
      %p530 = por %p528, %p529
      %p532 = scmp.ne.s32.totalorder %s515, %s531
      %p533 = scmp.eq.s32.totalorder %s36, 0
      %p534 = por %p532, %p533
      %p535 = scmp.le.s32.totalorder 1, %s30
      %p536 = scmp.lt.s32.totalorder %s30, 3
      %p537 = pnand %p535, %p536
      %p538 = pneg %p537
      // Predicated region
      $region9: #{feed_forward_retriever_forward.1} parent=5 // pred_check
        _
      $region10: #{feed_forward_retriever_forward.1} parent=5 // pred_check_branch
        %540 = sbr.rel (%p537) target = $region12
      $region11: #{feed_forward_retriever_forward.1} parent=5 // pred_region
        %s541 = ssub.s32 %s30, 1
        // Predicated region
        $region13: #{feed_forward_retriever_forward.1} parent=11 // pred_check
          %p542 = pneg %p207
        $region14: #{feed_forward_retriever_forward.1} parent=11 // pred_check_branch
          %544 = sbr.rel (%p542) target = $region16
        $region15: #{feed_forward_retriever_forward.1} parent=11 // pred_region
          _
        $region16: #{feed_forward_retriever_forward.1} parent=11 // pred_fallthru
          _
        // Predicated region
        $region17: #{feed_forward_retriever_forward.1} parent=11 // pred_check
          %p545 = pneg %p228
        $region18: #{feed_forward_retriever_forward.1} parent=11 // pred_check_branch
          %547 = sbr.rel (%p545) target = $region20
        $region19: #{feed_forward_retriever_forward.1} parent=11 // pred_region
          _
        $region20: #{feed_forward_retriever_forward.1} parent=11 // pred_fallthru
          _
        // Predicated region
        $region21: #{feed_forward_retriever_forward.1} parent=11 // pred_check
          %p548 = pneg %p249
        $region22: #{feed_forward_retriever_forward.1} parent=11 // pred_check_branch
          %550 = sbr.rel (%p548) target = $region24
        $region23: #{feed_forward_retriever_forward.1} parent=11 // pred_region
          _
        $region24: #{feed_forward_retriever_forward.1} parent=11 // pred_fallthru
          _
        // Predicated region
        $region25: #{feed_forward_retriever_forward.1} parent=11 // pred_check
          %p551 = pneg %p270
        $region26: #{feed_forward_retriever_forward.1} parent=11 // pred_check_branch
          %553 = sbr.rel (%p551) target = $region28
        $region27: #{feed_forward_retriever_forward.1} parent=11 // pred_region
          _
        $region28: #{feed_forward_retriever_forward.1} parent=11 // pred_fallthru
          _
        // Predicated region
        $region29: #{feed_forward_retriever_forward.1} parent=11 // pred_check
          %p554 = pneg %p291
        $region30: #{feed_forward_retriever_forward.1} parent=11 // pred_check_branch
          %556 = sbr.rel (%p554) target = $region32
        $region31: #{feed_forward_retriever_forward.1} parent=11 // pred_region
          _
        $region32: #{feed_forward_retriever_forward.1} parent=11 // pred_fallthru
          _
        // Predicated region
        $region33: #{feed_forward_retriever_forward.1} parent=11 // pred_check
          %p557 = pneg %p312
        $region34: #{feed_forward_retriever_forward.1} parent=11 // pred_check_branch
          %559 = sbr.rel (%p557) target = $region36
        $region35: #{feed_forward_retriever_forward.1} parent=11 // pred_region
          _
        $region36: #{feed_forward_retriever_forward.1} parent=11 // pred_fallthru
          _
        // Predicated region
        $region37: #{feed_forward_retriever_forward.1} parent=11 // pred_check
          %p560 = pneg %p333
        $region38: #{feed_forward_retriever_forward.1} parent=11 // pred_check_branch
          %562 = sbr.rel (%p560) target = $region40
        $region39: #{feed_forward_retriever_forward.1} parent=11 // pred_region
          _
        $region40: #{feed_forward_retriever_forward.1} parent=11 // pred_fallthru
          _
        // Predicated region
        $region41: #{feed_forward_retriever_forward.1} parent=11 // pred_check
          %p563 = pneg %p354
        $region42: #{feed_forward_retriever_forward.1} parent=11 // pred_check_branch
          %565 = sbr.rel (%p563) target = $region44
        $region43: #{feed_forward_retriever_forward.1} parent=11 // pred_region
          _
        $region44: #{feed_forward_retriever_forward.1} parent=11 // pred_fallthru
          _
        // Predicated region
        $region45: #{feed_forward_retriever_forward.1} parent=11 // pred_check
          %p566 = pneg %p375
        $region46: #{feed_forward_retriever_forward.1} parent=11 // pred_check_branch
          %568 = sbr.rel (%p566) target = $region48
        $region47: #{feed_forward_retriever_forward.1} parent=11 // pred_region
          _
        $region48: #{feed_forward_retriever_forward.1} parent=11 // pred_fallthru
          _
        // Predicated region
        $region49: #{feed_forward_retriever_forward.1} parent=11 // pred_check
          %p569 = pneg %p396
        $region50: #{feed_forward_retriever_forward.1} parent=11 // pred_check_branch
          %571 = sbr.rel (%p569) target = $region52
        $region51: #{feed_forward_retriever_forward.1} parent=11 // pred_region
          _
        $region52: #{feed_forward_retriever_forward.1} parent=11 // pred_fallthru
          _
        // Predicated region
        $region53: #{feed_forward_retriever_forward.1} parent=11 // pred_check
          %p572 = pneg %p417
        $region54: #{feed_forward_retriever_forward.1} parent=11 // pred_check_branch
          %574 = sbr.rel (%p572) target = $region56
        $region55: #{feed_forward_retriever_forward.1} parent=11 // pred_region
          _
        $region56: #{feed_forward_retriever_forward.1} parent=11 // pred_fallthru
          _
        // Predicated region
        $region57: #{feed_forward_retriever_forward.1} parent=11 // pred_check
          %p575 = pneg %p438
        $region58: #{feed_forward_retriever_forward.1} parent=11 // pred_check_branch
          %577 = sbr.rel (%p575) target = $region60
        $region59: #{feed_forward_retriever_forward.1} parent=11 // pred_region
          %579 = vsyncadd [#allocation4], 0
          %s580 = sshll.u32 %s17, 4
          %s581 = int_to_ptr.hbm [resolvable:$true] %s580
          %s582 = sshll.u32 [#allocation3], 4
          %s583 = int_to_ptr.vmem [resolvable:$true] %s582
          %588 = dma.hbm_to_vmem [thread:$0]  %s581, 2048, %s583, [#allocation4], 128, 128, 8
        $region60: #{feed_forward_retriever_forward.1} parent=11 // pred_fallthru
          _
        // Predicated region
        $region61: #{feed_forward_retriever_forward.1} parent=11 // pred_check
          %p589 = pneg %p459
        $region62: #{feed_forward_retriever_forward.1} parent=11 // pred_check_branch
          %591 = sbr.rel (%p589) target = $region64
        $region63: #{feed_forward_retriever_forward.1} parent=11 // pred_region
          _
        $region64: #{feed_forward_retriever_forward.1} parent=11 // pred_fallthru
          _
        // Predicated region
        $region65: #{feed_forward_retriever_forward.1} parent=11 // pred_check
          %p592 = pneg %p480
        $region66: #{feed_forward_retriever_forward.1} parent=11 // pred_check_branch
          %594 = sbr.rel (%p592) target = $region68
        $region67: #{feed_forward_retriever_forward.1} parent=11 // pred_region
          _
        $region68: #{feed_forward_retriever_forward.1} parent=11 // pred_fallthru
          _
        // Predicated region
        $region69: #{feed_forward_retriever_forward.1} parent=11 // pred_check
          %p595 = pneg %p501
        $region70: #{feed_forward_retriever_forward.1} parent=11 // pred_check_branch
          %597 = sbr.rel (%p595) target = $region72
        $region71: #{feed_forward_retriever_forward.1} parent=11 // pred_region
          _
        $region72: #{feed_forward_retriever_forward.1} parent=11 // pred_fallthru
          _
      $region12: #{feed_forward_retriever_forward.1} parent=5 // pred_fallthru
        _
      %p598 = scmp.lt.s32.totalorder %s30, 2
      // Predicated region
      $region73: #{feed_forward_retriever_forward.1} parent=5 // pred_check
        %p599 = pneg %p598
      $region74: #{feed_forward_retriever_forward.1} parent=5 // pred_check_branch
        %601 = sbr.rel (%p599) target = $region76
      $region75: #{feed_forward_retriever_forward.1} parent=5 // pred_region
        // Predicated region
        $region77: #{feed_forward_retriever_forward.1} parent=75 // pred_check
          %p602 = pneg %p50
        $region78: #{feed_forward_retriever_forward.1} parent=75 // pred_check_branch
          %604 = sbr.rel (%p602) target = $region80
        $region79: #{feed_forward_retriever_forward.1} parent=75 // pred_region
          %p605 = scmp.lt.s32.totalorder %s30, 1
          %s606 = scalar_select %p605, %s30, 1
          %s607 = smul.addr %s606, 8
          %s608 = scalar_lea.vmem %s0, %s607
        $region80: #{feed_forward_retriever_forward.1} parent=75 // pred_fallthru
          _
        // Predicated region
        $region81: #{feed_forward_retriever_forward.1} parent=75 // pred_check
          %p609 = pneg %p76
        $region82: #{feed_forward_retriever_forward.1} parent=75 // pred_check_branch
          %611 = sbr.rel (%p609) target = $region84
        $region83: #{feed_forward_retriever_forward.1} parent=75 // pred_region
          %p612 = scmp.lt.s32.totalorder %s30, 1
          %s613 = scalar_select %p612, %s30, 1
          %s614 = smul.addr %s613, 8
          %s615 = scalar_lea.vmem %s1, %s614
        $region84: #{feed_forward_retriever_forward.1} parent=75 // pred_fallthru
          _
        // Predicated region
        $region85: #{feed_forward_retriever_forward.1} parent=75 // pred_check
          %p616 = pneg %p102
        $region86: #{feed_forward_retriever_forward.1} parent=75 // pred_check_branch
          %618 = sbr.rel (%p616) target = $region88
        $region87: #{feed_forward_retriever_forward.1} parent=75 // pred_region
          %p619 = scmp.lt.s32.totalorder %s30, 1
          %s620 = scalar_select %p619, %s30, 1
          %s621 = scalar_lea.vmem %s2, %s620
        $region88: #{feed_forward_retriever_forward.1} parent=75 // pred_fallthru
          _
        // Predicated region
        $region89: #{feed_forward_retriever_forward.1} parent=75 // pred_check
          %p622 = pneg %p128
        $region90: #{feed_forward_retriever_forward.1} parent=75 // pred_check_branch
          %624 = sbr.rel (%p622) target = $region92
        $region91: #{feed_forward_retriever_forward.1} parent=75 // pred_region
          %p625 = scmp.lt.s32.totalorder %s30, 1
          %s626 = scalar_select %p625, %s30, 1
          %s627 = smul.addr %s626, 8
          %s628 = smul.addr %s627, 8
          %s629 = scalar_lea.vmem %s3, %s628
        $region92: #{feed_forward_retriever_forward.1} parent=75 // pred_fallthru
          _
        // Predicated region
        $region93: #{feed_forward_retriever_forward.1} parent=75 // pred_check
          %p630 = pneg %p154
        $region94: #{feed_forward_retriever_forward.1} parent=75 // pred_check_branch
          %632 = sbr.rel (%p630) target = $region96
        $region95: #{feed_forward_retriever_forward.1} parent=75 // pred_region
          %p633 = scmp.lt.s32.totalorder %s30, 1
          %s634 = scalar_select %p633, %s30, 1
          %s635 = smul.addr %s634, 8
          %s636 = smul.addr %s635, 8
          %s637 = scalar_lea.vmem %s4, %s636
        $region96: #{feed_forward_retriever_forward.1} parent=75 // pred_fallthru
          _
        // Predicated region
        $region97: #{feed_forward_retriever_forward.1} parent=75 // pred_check
          %p638 = pneg %p180
        $region98: #{feed_forward_retriever_forward.1} parent=75 // pred_check_branch
          %640 = sbr.rel (%p638) target = $region100
        $region99: #{feed_forward_retriever_forward.1} parent=75 // pred_region
          %p641 = scmp.lt.s32.totalorder %s30, 1
          %s642 = scalar_select %p641, %s30, 1
          %s643 = smul.addr %s642, 8
          %s644 = scalar_lea.vmem %s5, %s643
        $region100: #{feed_forward_retriever_forward.1} parent=75 // pred_fallthru
          _
      $region76: #{feed_forward_retriever_forward.1} parent=5 // pred_fallthru
        _
      %p645 = scmp.le.s32.totalorder 1, %s30
      %p646 = scmp.lt.s32.totalorder %s30, 3
      %p647 = pnand %p645, %p646
      %p648 = pneg %p647
      // Predicated region
      $region101: #{feed_forward_retriever_forward.1} parent=5 // pred_check
        _
      $region102: #{feed_forward_retriever_forward.1} parent=5 // pred_check_branch
        %650 = sbr.rel (%p647) target = $region104
      $region103: #{feed_forward_retriever_forward.1} parent=5 // pred_region
        %s651 = ssub.s32 %s30, 1
        // Predicated region
        $region105: #{feed_forward_retriever_forward.1} parent=103 // pred_check
          %p652 = pneg %p438
        $region106: #{feed_forward_retriever_forward.1} parent=103 // pred_check_branch
          %654 = sbr.rel (%p652) target = $region108
        $region107: #{feed_forward_retriever_forward.1} parent=103 // pred_region
          %656 = dma.done [#allocation4], 2048
        $region108: #{feed_forward_retriever_forward.1} parent=103 // pred_fallthru
          _
        %p657 = scmp.lt.s32.totalorder %s35, 1
        %s658 = scalar_select %p657, %s35, 1
        %s659 = smul.addr %s658, 8
        %s660 = scalar_lea.vmem %s0, %s659
        %p661 = pneg %p56
        %p662 = pneg %p53
        %p663 = scmp.lt.s32.totalorder %s35, 1
        %s664 = scalar_select %p663, %s35, 1
        %s665 = smul.addr %s664, 8
        %s666 = scalar_lea.vmem %s1, %s665
        %p667 = pneg %p82
        %p668 = pneg %p79
        %p669 = scmp.lt.s32.totalorder %s35, 1
        %s670 = scalar_select %p669, %s35, 1
        %s671 = scalar_lea.vmem %s2, %s670
        %p672 = pneg %p108
        %p673 = pneg %p105
        %p674 = scmp.lt.s32.totalorder %s35, 1
        %s675 = scalar_select %p674, %s35, 1
        %s676 = smul.addr %s675, 8
        %s677 = smul.addr %s676, 8
        %s678 = scalar_lea.vmem %s3, %s677
        %p679 = pneg %p134
        %p680 = pneg %p131
        %p681 = scmp.lt.s32.totalorder %s35, 1
        %s682 = scalar_select %p681, %s35, 1
        %s683 = smul.addr %s682, 8
        %s684 = smul.addr %s683, 8
        %s685 = scalar_lea.vmem %s4, %s684
        %p686 = pneg %p160
        %p687 = pneg %p157
        %p688 = scmp.lt.s32.totalorder %s35, 1
        %s689 = scalar_select %p688, %s35, 1
        %s690 = smul.addr %s689, 8
        %s691 = scalar_lea.vmem %s5, %s690
        %p692 = pneg %p186
        %p693 = pneg %p183
        %p694 = pneg %p207
        %p695 = pneg %p204
        %p696 = pneg %p228
        %p697 = pneg %p225
        %p698 = pneg %p249
        %p699 = pneg %p246
        %p700 = pneg %p270
        %p701 = pneg %p267
        %p702 = pneg %p291
        %p703 = pneg %p288
        %p704 = pneg %p312
        %p705 = pneg %p309
        %p706 = pneg %p333
        %p707 = pneg %p330
        %p708 = pneg %p354
        %p709 = pneg %p351
        %p710 = pneg %p375
        %p711 = pneg %p372
        %p712 = pneg %p396
        %p713 = pneg %p393
        %p714 = pneg %p417
        %p715 = pneg %p414
        %p716 = pneg %p438
        %p717 = pneg %p435
        %p718 = pneg %p459
        %p719 = pneg %p456
        %p720 = pneg %p480
        %p721 = pneg %p477
        %p722 = pneg %p501
        %p723 = pneg %p498
        %p724 = pneg %p527
        %p725 = pneg %p524
        %p726 = scmp.lt.s32.totalorder %s35, 1
        %s727 = scalar_select %p726, %s35, 1
        %s728 = smul.addr %s727, 8
        %s729 = scalar_lea.vmem %s21, %s728
        %p730 = scmp.lt.s32.totalorder %s35, 1
        %s731 = scalar_select %p730, %s35, 1
        %s732 = smul.addr %s731, 8
        %s733 = scalar_lea.vmem %s0, %s732
        %p734 = scmp.lt.s32.totalorder %s35, 1
        %s735 = scalar_select %p734, %s35, 1
        %s736 = smul.addr %s735, 8
        %s737 = scalar_lea.vmem %s1, %s736
        %p738 = scmp.lt.s32.totalorder %s35, 1
        %s739 = scalar_select %p738, %s35, 1
        %s740 = scalar_lea.vmem %s2, %s739
        %p741 = scmp.lt.s32.totalorder %s35, 1
        %s742 = scalar_select %p741, %s35, 1
        %s743 = smul.addr %s742, 8
        %s744 = smul.addr %s743, 8
        %s745 = scalar_lea.vmem %s3, %s744
        %p746 = scmp.lt.s32.totalorder %s35, 1
        %s747 = scalar_select %p746, %s35, 1
        %s748 = smul.addr %s747, 8
        %s749 = smul.addr %s748, 8
        %s750 = scalar_lea.vmem %s4, %s749
        %p751 = scmp.lt.s32.totalorder %s35, 1
        %s752 = scalar_select %p751, %s35, 1
        %s753 = smul.addr %s752, 8
        %s754 = scalar_lea.vmem %s5, %s753
        %p755 = scmp.lt.s32.totalorder %s35, 1
        %s756 = scalar_select %p755, %s35, 1
        %s757 = smul.addr %s756, 8
        %s758 = scalar_lea.vmem %s21, %s757
        %v759 = vld [vmem:[%s733] sm:$0xff]
        %v760 = vld [vmem:[%s737] sm:$0xff]
        %v761 = vld [vmem:[%s6] sm:$0xff]
        %v762 = vld [vmem:[%s6 + $0x8] sm:$0xff]
        %v763 = vld [vmem:[%s6 + $0x10] sm:$0xff]
        %v764 = vld [vmem:[%s6 + $0x18] sm:$0xff]
        %v765 = vld [vmem:[%s6 + $0x20] sm:$0xff]
        %v766 = vld [vmem:[%s6 + $0x28] sm:$0xff]
        %v767 = vld [vmem:[%s6 + $0x30] sm:$0xff]
        %v768 = vld [vmem:[%s6 + $0x38] sm:$0xff]
        %v769 = vld [vmem:[%s6 + $0x40] sm:$0xff]
        %v770 = vld [vmem:[%s6 + $0x48] sm:$0xff]
        %v771 = vld [vmem:[%s6 + $0x50] sm:$0xff]
        %v772 = vld [vmem:[%s6 + $0x58] sm:$0xff]
        %v773 = vld [vmem:[%s6 + $0x60] sm:$0xff]
        %v774 = vld [vmem:[%s6 + $0x68] sm:$0xff]
        %v775 = vld [vmem:[%s6 + $0x70] sm:$0xff]
        %v776 = vld [vmem:[%s6 + $0x78] sm:$0xff]
        %v777 = vld [vmem:[%s7] sm:$0xff]
        %v778 = vlaneseq
        %v779 = vand.u32 %v778, 127
        %780 = vset.pattern.permute.xlu0 0
        %781 = vperm.xlu0 %780, %v759
        %v782 = vpop.permute.xlu0 %781
        %vm783 = vcmp.eq.s32.totalorder %v782, %v779
        %v784 = vsel %vm783, 1, 0
        %v785 = vcvt.s32.f32 %v784
        %v786 = vperm.slane %v777, 0
        %787 = vmatpush.msra.mxu0 %v776
        %788 = vmatpush.msra.mxu0 %v775
        %789 = vmatpush.msra.mxu0 %v774
        %790 = vmatpush.msra.mxu0 %v773
        %791 = vmatpush.msra.mxu0 %v772
        %792 = vmatpush.msra.mxu0 %v771
        %793 = vmatpush.msra.mxu0 %v770
        %794 = vmatpush.msra.mxu0 %v769
        %795 = vmatpush.msra.mxu0 %v768
        %796 = vmatpush.msra.mxu0 %v767
        %797 = vmatpush.msra.mxu0 %v766
        %798 = vmatpush.msra.mxu0 %v765
        %799 = vmatpush.msra.mxu0 %v764
        %800 = vmatpush.msra.mxu0 %v763
        %801 = vmatpush.msra.mxu0 %v762
        %802 = vmatpush.msra.mxu0 %v761
        %803 = vmatmul.f32.gmra.mxu0 %v785
        %v804 = vpop.f32.mrf.mxu0
        %v805 = vadd.f32 %v786, %v804
        %806 = vdwg.mxu0
        %v807 = vcvt.s32.f32 %v760
        %v809 = vrot.slane %v777, 7
        %v811 = vsub.f32 %v777, %v809
        %813 = vset.pattern.permute.xlu0 0
        %814 = vperm.xlu0 %813, %v807
        %v815 = vpop.permute.xlu0 %814
        %v817 = vperm.slane %v811, 1
        %v818 = vmul.f32 %v815, %v817
        %v819 = vadd.f32 %v805, %v818
        %v820 = vld [vmem:[%s740] sm:$0x1]
        %v821 = vld [vmem:[%s8] sm:$0xff]
        %v822 = vld [vmem:[%s8 + $0x8] sm:$0xff]
        %v823 = vld [vmem:[%s8 + $0x10] sm:$0xff]
        %v824 = vld [vmem:[%s8 + $0x18] sm:$0xff]
        %v825 = vld [vmem:[%s8 + $0x20] sm:$0xff]
        %v826 = vld [vmem:[%s8 + $0x28] sm:$0xff]
        %v827 = vld [vmem:[%s8 + $0x30] sm:$0xff]
        %v828 = vld [vmem:[%s8 + $0x38] sm:$0xff]
        %v829 = vld [vmem:[%s8 + $0x40] sm:$0xff]
        %v830 = vld [vmem:[%s8 + $0x48] sm:$0xff]
        %v831 = vld [vmem:[%s8 + $0x50] sm:$0xff]
        %v832 = vld [vmem:[%s8 + $0x58] sm:$0xff]
        %v833 = vld [vmem:[%s8 + $0x60] sm:$0xff]
        %v834 = vld [vmem:[%s8 + $0x68] sm:$0xff]
        %v835 = vld [vmem:[%s8 + $0x70] sm:$0xff]
        %v836 = vld [vmem:[%s8 + $0x78] sm:$0xff]
        %v837 = vld [vmem:[%s9] sm:$0x1]
        %vm838 = vcmask 64512
        %v840 = vsel %vm838, %v820, 0
        %842 = vmatpush.msra.mxu0 0.0
        %843 = vmatpush.msra.mxu0 0.0
        %844 = vmatpush.msra.mxu0 0.0
        %845 = vmatpush.msra.mxu0 0.0
        %846 = vmatpush.msra.mxu0 0.0
        %847 = vmatpush.msra.mxu0 0.0
        %848 = vmatpush.msra.mxu0 0.0
        %849 = vmatpush.msra.mxu0 0.0
        %850 = vmatpush.msra.mxu0 0.0
        %851 = vmatpush.msra.mxu0 0.0
        %852 = vmatpush.msra.mxu0 0.0
        %853 = vmatpush.msra.mxu0 0.0
        %854 = vmatpush.msra.mxu0 0.0
        %855 = vmatpush.msra.mxu0 0.0
        %856 = vmatpush.msra.mxu0 0.0
        %857 = vmatpush.msra.mxu0 %v819
        %858 = vmatmul.f32.gmra.mxu0 %v840
        %v859 = vpop.f32.mrf.mxu0
        %v860 = vadd.f32 0.0, %v859
        %861 = vdwg.mxu0
        %vm862 = vcmask 57344
        %v863 = vsel %vm862, %v820, 0.0
        %864 = vadd.xlane.f32.xlu0 %v863
        %v865 = vpop.xlane.xlu0 %864
        %v866 = vmax.f32 %v865, 1.0
        %v867 = vrcp.pop %v866
        %v868 = vmul.f32 %v860, %v867
        %869 = vmatpush.msra.mxu0 %v836
        %870 = vmatpush.msra.mxu0 %v835
        %871 = vmatpush.msra.mxu0 %v834
        %872 = vmatpush.msra.mxu0 %v833
        %873 = vmatpush.msra.mxu0 %v832
        %874 = vmatpush.msra.mxu0 %v831
        %875 = vmatpush.msra.mxu0 %v830
        %876 = vmatpush.msra.mxu0 %v829
        %877 = vmatpush.msra.mxu0 %v828
        %878 = vmatpush.msra.mxu0 %v827
        %879 = vmatpush.msra.mxu0 %v826
        %880 = vmatpush.msra.mxu0 %v825
        %881 = vmatpush.msra.mxu0 %v824
        %882 = vmatpush.msra.mxu0 %v823
        %883 = vmatpush.msra.mxu0 %v822
        %884 = vmatpush.msra.mxu0 %v821
        %885 = vmatmul.f32.gmra.mxu0 %v868
        %v886 = vpop.f32.mrf.mxu0
        %v887 = vadd.f32 %v837, %v886
        %888 = vdwg.mxu0
        %v889 = vtanh.pop %v887
        %v890 = vld [vmem:[%s745] sm:$0xff]
        %v891 = vld [vmem:[%s745 + $0x8] sm:$0xff]
        %v892 = vld [vmem:[%s745 + $0x10] sm:$0xff]
        %v893 = vld [vmem:[%s745 + $0x18] sm:$0xff]
        %v894 = vld [vmem:[%s745 + $0x20] sm:$0xff]
        %v895 = vld [vmem:[%s745 + $0x28] sm:$0xff]
        %v896 = vld [vmem:[%s745 + $0x30] sm:$0xff]
        %v897 = vld [vmem:[%s745 + $0x38] sm:$0xff]
        %v898 = vld [vmem:[%s750] sm:$0xff]
        %v899 = vld [vmem:[%s750 + $0x8] sm:$0xff]
        %v900 = vld [vmem:[%s750 + $0x10] sm:$0xff]
        %v901 = vld [vmem:[%s750 + $0x18] sm:$0xff]
        %v902 = vld [vmem:[%s750 + $0x20] sm:$0xff]
        %v903 = vld [vmem:[%s750 + $0x28] sm:$0xff]
        %v904 = vld [vmem:[%s750 + $0x30] sm:$0xff]
        %v905 = vld [vmem:[%s750 + $0x38] sm:$0xff]
        %v906 = vld [vmem:[%s10] sm:$0xff]
        %v907 = vld [vmem:[%s10 + $0x8] sm:$0xff]
        %v908 = vld [vmem:[%s10 + $0x10] sm:$0xff]
        %v909 = vld [vmem:[%s10 + $0x18] sm:$0xff]
        %v910 = vld [vmem:[%s10 + $0x20] sm:$0xff]
        %v911 = vld [vmem:[%s10 + $0x28] sm:$0xff]
        %v912 = vld [vmem:[%s10 + $0x30] sm:$0xff]
        %v913 = vld [vmem:[%s10 + $0x38] sm:$0xff]
        %v914 = vld [vmem:[%s10 + $0x40] sm:$0xff]
        %v915 = vld [vmem:[%s10 + $0x48] sm:$0xff]
        %v916 = vld [vmem:[%s10 + $0x50] sm:$0xff]
        %v917 = vld [vmem:[%s10 + $0x58] sm:$0xff]
        %v918 = vld [vmem:[%s10 + $0x60] sm:$0xff]
        %v919 = vld [vmem:[%s10 + $0x68] sm:$0xff]
        %v920 = vld [vmem:[%s10 + $0x70] sm:$0xff]
        %v921 = vld [vmem:[%s10 + $0x78] sm:$0xff]
        %v922 = vld [vmem:[%s11] sm:$0xff]
        %923 = vset.pattern.permute.xlu0 0
        %924 = vperm.xlu0 %923, %v890
        %v925 = vpop.permute.xlu0 %924
        %926 = vset.pattern.permute.xlu0 0
        %927 = vperm.xlu0 %926, %v891
        %v928 = vpop.permute.xlu0 %927
        %929 = vset.pattern.permute.xlu0 0
        %930 = vperm.xlu0 %929, %v892
        %v931 = vpop.permute.xlu0 %930
        %932 = vset.pattern.permute.xlu0 0
        %933 = vperm.xlu0 %932, %v893
        %v934 = vpop.permute.xlu0 %933
        %935 = vset.pattern.permute.xlu0 0
        %936 = vperm.xlu0 %935, %v894
        %v937 = vpop.permute.xlu0 %936
        %938 = vset.pattern.permute.xlu0 0
        %939 = vperm.xlu0 %938, %v895
        %v940 = vpop.permute.xlu0 %939
        %941 = vset.pattern.permute.xlu0 0
        %942 = vperm.xlu0 %941, %v896
        %v943 = vpop.permute.xlu0 %942
        %944 = vset.pattern.permute.xlu0 0
        %945 = vperm.xlu0 %944, %v897
        %v946 = vpop.permute.xlu0 %945
        %vm947 = vcmp.eq.s32.totalorder %v925, %v779
        %vm948 = vcmp.eq.s32.totalorder %v928, %v779
        %vm949 = vcmp.eq.s32.totalorder %v931, %v779
        %vm950 = vcmp.eq.s32.totalorder %v934, %v779
        %vm951 = vcmp.eq.s32.totalorder %v937, %v779
        %vm952 = vcmp.eq.s32.totalorder %v940, %v779
        %vm953 = vcmp.eq.s32.totalorder %v943, %v779
        %vm954 = vcmp.eq.s32.totalorder %v946, %v779
        %v955 = vsel %vm947, 1, 0
        %v956 = vsel %vm948, 1, 0
        %v957 = vsel %vm949, 1, 0
        %v958 = vsel %vm950, 1, 0
        %v959 = vsel %vm951, 1, 0
        %v960 = vsel %vm952, 1, 0
        %v961 = vsel %vm953, 1, 0
        %v962 = vsel %vm954, 1, 0
        %v963 = vcvt.s32.f32 %v955
        %v964 = vcvt.s32.f32 %v956
        %v965 = vcvt.s32.f32 %v957
        %v966 = vcvt.s32.f32 %v958
        %v967 = vcvt.s32.f32 %v959
        %v968 = vcvt.s32.f32 %v960
        %v969 = vcvt.s32.f32 %v961
        %v970 = vcvt.s32.f32 %v962
        %v971 = vperm.slane %v922, 0
        %972 = vmatpush.msra.mxu0 %v921
        %973 = vmatpush.msra.mxu0 %v920
        %974 = vmatpush.msra.mxu0 %v919
        %975 = vmatpush.msra.mxu0 %v918
        %976 = vmatpush.msra.mxu0 %v917
        %977 = vmatpush.msra.mxu0 %v916
        %978 = vmatpush.msra.mxu0 %v915
        %979 = vmatpush.msra.mxu0 %v914
        %980 = vmatpush.msra.mxu0 %v913
        %981 = vmatpush.msra.mxu0 %v912
        %982 = vmatpush.msra.mxu0 %v911
        %983 = vmatpush.msra.mxu0 %v910
        %984 = vmatpush.msra.mxu0 %v909
        %985 = vmatpush.msra.mxu0 %v908
        %986 = vmatpush.msra.mxu0 %v907
        %987 = vmatpush.msra.mxu0 %v906
        %988 = vmatmul.f32.gmra.mxu0 %v963
        %v989 = vpop.f32.mrf.mxu0
        %v990 = vadd.f32 %v971, %v989
        %991 = vmatmul.f32.gmra.mxu0 %v964
        %v992 = vpop.f32.mrf.mxu0
        %v993 = vadd.f32 %v971, %v992
        %994 = vmatmul.f32.gmra.mxu0 %v965
        %v995 = vpop.f32.mrf.mxu0
        %v996 = vadd.f32 %v971, %v995
        %997 = vmatmul.f32.gmra.mxu0 %v966
        %v998 = vpop.f32.mrf.mxu0
        %v999 = vadd.f32 %v971, %v998
        %1000 = vmatmul.f32.gmra.mxu0 %v967
        %v1001 = vpop.f32.mrf.mxu0
        %v1002 = vadd.f32 %v971, %v1001
        %1003 = vmatmul.f32.gmra.mxu0 %v968
        %v1004 = vpop.f32.mrf.mxu0
        %v1005 = vadd.f32 %v971, %v1004
        %1006 = vmatmul.f32.gmra.mxu0 %v969
        %v1007 = vpop.f32.mrf.mxu0
        %v1008 = vadd.f32 %v971, %v1007
        %1009 = vmatmul.f32.gmra.mxu0 %v970
        %v1010 = vpop.f32.mrf.mxu0
        %v1011 = vadd.f32 %v971, %v1010
        %1012 = vdwg.mxu0
        %v1013 = vcvt.s32.f32 %v898
        %v1014 = vcvt.s32.f32 %v899
        %v1015 = vcvt.s32.f32 %v900
        %v1016 = vcvt.s32.f32 %v901
        %v1017 = vcvt.s32.f32 %v902
        %v1018 = vcvt.s32.f32 %v903
        %v1019 = vcvt.s32.f32 %v904
        %v1020 = vcvt.s32.f32 %v905
        %v1022 = vrot.slane %v922, 7
        %v1024 = vsub.f32 %v922, %v1022
        %1026 = vset.pattern.permute.xlu0 0
        %1027 = vperm.xlu0 %1026, %v1013
        %v1028 = vpop.permute.xlu0 %1027
        %1031 = vset.pattern.permute.xlu0 0
        %1032 = vperm.xlu0 %1031, %v1014
        %v1033 = vpop.permute.xlu0 %1032
        %1036 = vset.pattern.permute.xlu0 0
        %1037 = vperm.xlu0 %1036, %v1015
        %v1038 = vpop.permute.xlu0 %1037
        %1041 = vset.pattern.permute.xlu0 0
        %1042 = vperm.xlu0 %1041, %v1016
        %v1043 = vpop.permute.xlu0 %1042
        %1046 = vset.pattern.permute.xlu0 0
        %1047 = vperm.xlu0 %1046, %v1017
        %v1048 = vpop.permute.xlu0 %1047
        %1051 = vset.pattern.permute.xlu0 0
        %1052 = vperm.xlu0 %1051, %v1018
        %v1053 = vpop.permute.xlu0 %1052
        %1056 = vset.pattern.permute.xlu0 0
        %1057 = vperm.xlu0 %1056, %v1019
        %v1058 = vpop.permute.xlu0 %1057
        %1061 = vset.pattern.permute.xlu0 0
        %1062 = vperm.xlu0 %1061, %v1020
        %v1063 = vpop.permute.xlu0 %1062
        %v1065 = vperm.slane %v1024, 1
        %v1066 = vmul.f32 %v1028, %v1065
        %v1067 = vmul.f32 %v1033, %v1065
        %v1068 = vmul.f32 %v1038, %v1065
        %v1069 = vmul.f32 %v1043, %v1065
        %v1070 = vmul.f32 %v1048, %v1065
        %v1071 = vmul.f32 %v1053, %v1065
        %v1072 = vmul.f32 %v1058, %v1065
        %v1073 = vmul.f32 %v1063, %v1065
        %v1074 = vadd.f32 %v990, %v1066
        %v1075 = vadd.f32 %v993, %v1067
        %v1076 = vadd.f32 %v996, %v1068
        %v1077 = vadd.f32 %v999, %v1069
        %v1078 = vadd.f32 %v1002, %v1070
        %v1079 = vadd.f32 %v1005, %v1071
        %v1080 = vadd.f32 %v1008, %v1072
        %v1081 = vadd.f32 %v1011, %v1073
        %v1082 = vld [vmem:[%s754] sm:$0xff]
        %v1083 = vld [vmem:[%s12] sm:$0xff]
        %v1084 = vld [vmem:[%s12 + $0x8] sm:$0xff]
        %v1085 = vld [vmem:[%s12 + $0x10] sm:$0xff]
        %v1086 = vld [vmem:[%s12 + $0x18] sm:$0xff]
        %v1087 = vld [vmem:[%s12 + $0x20] sm:$0xff]
        %v1088 = vld [vmem:[%s12 + $0x28] sm:$0xff]
        %v1089 = vld [vmem:[%s12 + $0x30] sm:$0xff]
        %v1090 = vld [vmem:[%s12 + $0x38] sm:$0xff]
        %v1091 = vld [vmem:[%s12 + $0x40] sm:$0xff]
        %v1092 = vld [vmem:[%s12 + $0x48] sm:$0xff]
        %v1093 = vld [vmem:[%s12 + $0x50] sm:$0xff]
        %v1094 = vld [vmem:[%s12 + $0x58] sm:$0xff]
        %v1095 = vld [vmem:[%s12 + $0x60] sm:$0xff]
        %v1096 = vld [vmem:[%s12 + $0x68] sm:$0xff]
        %v1097 = vld [vmem:[%s12 + $0x70] sm:$0xff]
        %v1098 = vld [vmem:[%s12 + $0x78] sm:$0xff]
        %v1099 = vld [vmem:[%s13] sm:$0x1]
        %vm1100 = vcmask 523264
        %v1102 = vsel %vm1100, %v1082, 0
        %1104 = vmatpush.msra.mxu0 0.0
        %1105 = vmatpush.msra.mxu0 0.0
        %1106 = vmatpush.msra.mxu0 0.0
        %1107 = vmatpush.msra.mxu0 0.0
        %1108 = vmatpush.msra.mxu0 0.0
        %1109 = vmatpush.msra.mxu0 0.0
        %1110 = vmatpush.msra.mxu0 0.0
        %1111 = vmatpush.msra.mxu0 0.0
        %1112 = vmatpush.msra.mxu0 %v1081
        %1113 = vmatpush.msra.mxu0 %v1080
        %1114 = vmatpush.msra.mxu0 %v1079
        %1115 = vmatpush.msra.mxu0 %v1078
        %1116 = vmatpush.msra.mxu0 %v1077
        %1117 = vmatpush.msra.mxu0 %v1076
        %1118 = vmatpush.msra.mxu0 %v1075
        %1119 = vmatpush.msra.mxu0 %v1074
        %1120 = vmatmul.f32.gmra.mxu0 %v1102
        %v1121 = vpop.f32.mrf.mxu0
        %v1122 = vadd.f32 0.0, %v1121
        %1123 = vdwg.mxu0
        %v1124 = vsel %vm1100, %v1082, 0.0
        %1125 = vadd.xlane.f32.xlu0 %v1124
        %v1126 = vpop.xlane.xlu0 %1125
        %v1127 = vmax.f32 %v1126, 1.0
        %v1128 = vrcp.pop %v1127
        %v1129 = vmul.f32 %v1122, %v1128
        %v1131 = vperm.slane %v1099, 0
        %1133 = vmatpush.msra.mxu0 %v1098
        %1134 = vmatpush.msra.mxu0 %v1097
        %1135 = vmatpush.msra.mxu0 %v1096
        %1136 = vmatpush.msra.mxu0 %v1095
        %1137 = vmatpush.msra.mxu0 %v1094
        %1138 = vmatpush.msra.mxu0 %v1093
        %1139 = vmatpush.msra.mxu0 %v1092
        %1140 = vmatpush.msra.mxu0 %v1091
        %1141 = vmatpush.msra.mxu0 %v1090
        %1142 = vmatpush.msra.mxu0 %v1089
        %1143 = vmatpush.msra.mxu0 %v1088
        %1144 = vmatpush.msra.mxu0 %v1087
        %1145 = vmatpush.msra.mxu0 %v1086
        %1146 = vmatpush.msra.mxu0 %v1085
        %1147 = vmatpush.msra.mxu0 %v1084
        %1148 = vmatpush.msra.mxu0 %v1083
        %1149 = vmatmul.f32.gmra.mxu0 %v1129
        %v1150 = vpop.f32.mrf.mxu0
        %v1151 = vadd.f32 %v1131, %v1150
        %1152 = vdwg.mxu0
        %v1153 = vtanh.pop %v1151
        %v1154 = vld [vmem:[%s15] sm:$0xff]
        %v1155 = vld [vmem:[%s15 + $0x8] sm:$0xff]
        %v1156 = vld [vmem:[%s15 + $0x10] sm:$0xff]
        %v1157 = vld [vmem:[%s15 + $0x18] sm:$0xff]
        %v1158 = vld [vmem:[%s15 + $0x20] sm:$0xff]
        %v1159 = vld [vmem:[%s15 + $0x28] sm:$0xff]
        %v1160 = vld [vmem:[%s15 + $0x30] sm:$0xff]
        %v1161 = vld [vmem:[%s15 + $0x38] sm:$0xff]
        %v1162 = vld [vmem:[%s15 + $0x40] sm:$0xff]
        %v1163 = vld [vmem:[%s15 + $0x48] sm:$0xff]
        %v1164 = vld [vmem:[%s15 + $0x50] sm:$0xff]
        %v1165 = vld [vmem:[%s15 + $0x58] sm:$0xff]
        %v1166 = vld [vmem:[%s15 + $0x60] sm:$0xff]
        %v1167 = vld [vmem:[%s15 + $0x68] sm:$0xff]
        %v1168 = vld [vmem:[%s15 + $0x70] sm:$0xff]
        %v1169 = vld [vmem:[%s15 + $0x78] sm:$0xff]
        %v1170 = vld [vmem:[%s14] sm:$0xff]
        %v1171 = vld [vmem:[%s14 + $0x8] sm:$0xff]
        %v1172 = vld [vmem:[%s14 + $0x10] sm:$0xff]
        %v1173 = vld [vmem:[%s14 + $0x18] sm:$0xff]
        %v1174 = vld [vmem:[%s14 + $0x20] sm:$0xff]
        %v1175 = vld [vmem:[%s14 + $0x28] sm:$0xff]
        %v1176 = vld [vmem:[%s14 + $0x30] sm:$0xff]
        %v1177 = vld [vmem:[%s14 + $0x38] sm:$0xff]
        %v1178 = vld [vmem:[%s14 + $0x40] sm:$0xff]
        %v1179 = vld [vmem:[%s14 + $0x48] sm:$0xff]
        %v1180 = vld [vmem:[%s14 + $0x50] sm:$0xff]
        %v1181 = vld [vmem:[%s14 + $0x58] sm:$0xff]
        %v1182 = vld [vmem:[%s14 + $0x60] sm:$0xff]
        %v1183 = vld [vmem:[%s14 + $0x68] sm:$0xff]
        %v1184 = vld [vmem:[%s14 + $0x70] sm:$0xff]
        %v1185 = vld [vmem:[%s14 + $0x78] sm:$0xff]
        %1186 = vmatpush.msra.mxu0 %v1185
        %1187 = vmatpush.msra.mxu0 %v1184
        %1188 = vmatpush.msra.mxu0 %v1183
        %1189 = vmatpush.msra.mxu0 %v1182
        %1190 = vmatpush.msra.mxu0 %v1181
        %1191 = vmatpush.msra.mxu0 %v1180
        %1192 = vmatpush.msra.mxu0 %v1179
        %1193 = vmatpush.msra.mxu0 %v1178
        %1194 = vmatpush.msra.mxu0 %v1177
        %1195 = vmatpush.msra.mxu0 %v1176
        %1196 = vmatpush.msra.mxu0 %v1175
        %1197 = vmatpush.msra.mxu0 %v1174
        %1198 = vmatpush.msra.mxu0 %v1173
        %1199 = vmatpush.msra.mxu0 %v1172
        %1200 = vmatpush.msra.mxu0 %v1171
        %1201 = vmatpush.msra.mxu0 %v1170
        %1202 = vmatmul.f32.gmra.mxu0 %v889
        %v1203 = vpop.f32.mrf.mxu0
        %v1204 = vadd.f32 0.0, %v1203
        %1205 = vdwg.mxu0
        %v1206 = vperm.slane %v1204, 0
        %1207 = vmatpush.msra.mxu0 %v1169
        %1208 = vmatpush.msra.mxu0 %v1168
        %1209 = vmatpush.msra.mxu0 %v1167
        %1210 = vmatpush.msra.mxu0 %v1166
        %1211 = vmatpush.msra.mxu0 %v1165
        %1212 = vmatpush.msra.mxu0 %v1164
        %1213 = vmatpush.msra.mxu0 %v1163
        %1214 = vmatpush.msra.mxu0 %v1162
        %1215 = vmatpush.msra.mxu0 %v1161
        %1216 = vmatpush.msra.mxu0 %v1160
        %1217 = vmatpush.msra.mxu0 %v1159
        %1218 = vmatpush.msra.mxu0 %v1158
        %1219 = vmatpush.msra.mxu0 %v1157
        %1220 = vmatpush.msra.mxu0 %v1156
        %1221 = vmatpush.msra.mxu0 %v1155
        %1222 = vmatpush.msra.mxu0 %v1154
        %1223 = vmatmul.f32.gmra.mxu0 %v1153
        %v1224 = vpop.f32.mrf.mxu0
        %v1225 = vadd.f32 %v1206, %v1224
        %1226 = vdwg.mxu0
        %v1227 = vld [vmem:[%s16] sm:$0x1]
        %v1229 = vperm.slane %v1227, 0
        %v1231 = vadd.f32 %v1225, %v1229
        %v1232 = vmax.f32 %v1231, 0.0
        %v1233 = vld [vmem:[#allocation3] sm:$0xff]
        %v1234 = vld [vmem:[#allocation3 + $0x8] sm:$0xff]
        %v1235 = vld [vmem:[#allocation3 + $0x10] sm:$0xff]
        %v1236 = vld [vmem:[#allocation3 + $0x18] sm:$0xff]
        %v1237 = vld [vmem:[#allocation3 + $0x20] sm:$0xff]
        %v1238 = vld [vmem:[#allocation3 + $0x28] sm:$0xff]
        %v1239 = vld [vmem:[#allocation3 + $0x30] sm:$0xff]
        %v1240 = vld [vmem:[#allocation3 + $0x38] sm:$0xff]
        %v1241 = vld [vmem:[#allocation3 + $0x40] sm:$0xff]
        %v1242 = vld [vmem:[#allocation3 + $0x48] sm:$0xff]
        %v1243 = vld [vmem:[#allocation3 + $0x50] sm:$0xff]
        %v1244 = vld [vmem:[#allocation3 + $0x58] sm:$0xff]
        %v1245 = vld [vmem:[#allocation3 + $0x60] sm:$0xff]
        %v1246 = vld [vmem:[#allocation3 + $0x68] sm:$0xff]
        %v1247 = vld [vmem:[#allocation3 + $0x70] sm:$0xff]
        %v1248 = vld [vmem:[#allocation3 + $0x78] sm:$0xff]
        %v1249 = vld [vmem:[%s18] sm:$0x1]
        %v1251 = vperm.slane %v1249, 0
        %1253 = vmatpush.msra.mxu0 %v1248
        %1254 = vmatpush.msra.mxu0 %v1247
        %1255 = vmatpush.msra.mxu0 %v1246
        %1256 = vmatpush.msra.mxu0 %v1245
        %1257 = vmatpush.msra.mxu0 %v1244
        %1258 = vmatpush.msra.mxu0 %v1243
        %1259 = vmatpush.msra.mxu0 %v1242
        %1260 = vmatpush.msra.mxu0 %v1241
        %1261 = vmatpush.msra.mxu0 %v1240
        %1262 = vmatpush.msra.mxu0 %v1239
        %1263 = vmatpush.msra.mxu0 %v1238
        %1264 = vmatpush.msra.mxu0 %v1237
        %1265 = vmatpush.msra.mxu0 %v1236
        %1266 = vmatpush.msra.mxu0 %v1235
        %1267 = vmatpush.msra.mxu0 %v1234
        %1268 = vmatpush.msra.mxu0 %v1233
        %1269 = vmatmul.f32.gmra.mxu0 %v1232
        %v1270 = vpop.f32.mrf.mxu0
        %v1271 = vadd.f32 %v1251, %v1270
        %1272 = vdwg.mxu0
        %v1273 = vmax.f32 %v1271, 0.0
        %v1274 = vld [vmem:[%s19] sm:$0x1]
        %v1276 = vperm.slane %v1274, 0
        %v1278 = vmul.f32 %v1273, %v1276
        %1279 = vadd.xlane.f32.xlu0 %v1278
        %v1280 = vpop.xlane.xlu0 %1279
        %v1281 = vld [vmem:[#allocation2] sm:$0x1]
        %v1283 = vperm.slane %v1281, 0
        %v1285 = vadd.f32 %v1280, %v1283
        %1287 = vset.pattern.permute.xlu0 0
        %1288 = vperm.xlu0 %1287, %v1285
        %v1289 = vpop.permute.xlu0 %1288
        %1291 = vst [vmem:[%s758] sm:$0xff] %v1289
        %p1292 = scmp.lt.s32.totalorder %s35, 1
        %s1293 = scalar_select %p1292, %s35, 1
        %s1294 = smul.addr %s1293, 8
        %s1295 = scalar_lea.vmem %s21, %s1294
        // Predicated region
        $region109: #{feed_forward_retriever_forward.1} parent=103 // pred_check
          %p1296 = pneg %p524
        $region110: #{feed_forward_retriever_forward.1} parent=103 // pred_check_branch
          %1298 = sbr.rel (%p1296) target = $region112
        $region111: #{feed_forward_retriever_forward.1} parent=103 // pred_region
          _
        $region112: #{feed_forward_retriever_forward.1} parent=103 // pred_fallthru
          _
      $region104: #{feed_forward_retriever_forward.1} parent=5 // pred_fallthru
        _
      %p1299 = scmp.le.s32.totalorder 2, %s30
      // Predicated region
      $region113: #{feed_forward_retriever_forward.1} parent=5 // pred_check
        %p1300 = pneg %p1299
      $region114: #{feed_forward_retriever_forward.1} parent=5 // pred_check_branch
        %1302 = sbr.rel (%p1300) target = $region116
      $region115: #{feed_forward_retriever_forward.1} parent=5 // pred_region
        %s1303 = ssub.s32 %s30, 2
        // Predicated region
        $region117: #{feed_forward_retriever_forward.1} parent=115 // pred_check
          %p1304 = pneg %p530
        $region118: #{feed_forward_retriever_forward.1} parent=115 // pred_check_branch
          %1306 = sbr.rel (%p1304) target = $region120
        $region119: #{feed_forward_retriever_forward.1} parent=115 // pred_region
          %p1307 = scmp.lt.s32.totalorder %s36, 1
          %s1308 = scalar_select %p1307, %s36, 1
          %s1309 = smul.addr %s1308, 8
          %s1310 = scalar_lea.vmem %s21, %s1309
        $region120: #{feed_forward_retriever_forward.1} parent=115 // pred_fallthru
          _
      $region116: #{feed_forward_retriever_forward.1} parent=5 // pred_fallthru
        _
    $region6: #{feed_forward_retriever_forward.1} parent=1 // loop_footer
      %s34 = sadd.s32 1, %s30
    $region7: #{feed_forward_retriever_forward.1} parent=1 // loop_footer_branch
      %29 = sbr.rel target = $region3
    $region8: #{feed_forward_retriever_forward.1} parent=1 // loop_exit
      _
    %1311 = vsyncpa [#allocation4], 1
    %s1312 = scalar_lea.sflag [#allocation4], 1
    %1313 = vsyncpa %s1312, 1

</llo_original>
